<compile_context>
chip_gen: v7x
topology: tpu7x:2x2x1
jax: 0.10.0
libtpu: 0.0.40
codegen_flags: <defaults>
</compile_context>

<pallas_src>
import functools

import jax
import jax.numpy as jnp
from jax import lax
from jax.experimental import pallas as pl
from jax.experimental.pallas import tpu as pltpu


def _rnn_kernel(x_ref, wih_ref, whh_ref, b_ref, h0_ref, out_ref,
                u_scratch, h_scratch, *, decay, tt):
    """One grid step == one block of TT time steps for one batch shard.

    x_ref    : (1, TT, Bc, I)   time block (compute dtype)
    wih_ref  : (I, Hp)          (1-decay) * W_ih^T, zero-padded (compute dtype)
    whh_ref  : (Hp, Hp)         (1-decay) * W_hh^T, zero-padded (compute dtype)
    b_ref    : (1, Hp)          (1-decay) * bias, zero-padded (f32)
    h0_ref   : (Bc, Hp)         hidden_init[0] shard, zero-padded (f32)
    out_ref  : (1, TT, Bc, Hp)  stacked hidden states for this block
    u_scratch: (TT, Bc, Hp) f32 staged input projection
    h_scratch: (Bc, Hp)    f32  hidden-state carry across time blocks
    """
    tb = pl.program_id(1)   # time-block index (axis 0 is the parallel batch shard)

    @pl.when(tb == 0)
    def _():
        h_scratch[...] = h0_ref[...].astype(jnp.float32)

    # Hoisted input projection: one tall MXU matmul per time block, staged to
    # VMEM scratch so it does not stay live across the serial chain.
    xb = x_ref[0]                                     # (TT, Bc, I)
    bc = xb.shape[1]
    u = jnp.dot(xb.reshape(tt * bc, xb.shape[2]), wih_ref[...],
                preferred_element_type=jnp.float32)   # (TT*Bc, Hp) f32
    u_scratch[...] = (u + b_ref[...]).reshape(u_scratch.shape)

    whh = whh_ref[...]                                # (Hp, Hp), compute dtype
    cdt = whh.dtype

    # Serial recurrence: per step only (Bc,Hp)@(Hp,Hp) + the decay blend.
    # fori_loop(unroll=True) keeps live ranges bounded but fully visible.
    def step(j, h):
        pre = u_scratch[j] + jnp.dot(h.astype(cdt), whh,
                                     preferred_element_type=jnp.float32)
        h_new = decay * h + jnp.maximum(pre, 0.0)     # (1-decay) folded in
        out_ref[0, j] = h_new.astype(out_ref.dtype)
        return h_new

    h_scratch[...] = lax.fori_loop(0, tt, step, h_scratch[...], unroll=True)


def rnn_layer_forward(x, hidden_init, weight_ih, weight_hh, bias,
                      decay=0.9, time_block=16, batch_shards=1,
                      compute_dtype=jnp.bfloat16):
    """x: (T, B, I); hidden_init: (1, B, H); weight_ih: (H, I);
    weight_hh: (H, H); bias: (H,). Returns (outputs (T, B, H), final (B, H))."""
    T, B, I = x.shape
    H = weight_hh.shape[0]
    alpha = 1.0 - float(decay)
    # Folding (1-decay) into the weights requires alpha > 0 and a positively
    # homogeneous nonlinearity (ReLU). decay=0.9 default satisfies this.
    assert alpha > 0.0, "decay must be < 1 to fold (1-decay) into the weights"

    f32 = jnp.float32
    out_dtype = x.dtype

    # Lane-dense hidden width (multiple of 128). Zero padding is exactly
    # preserved by the recurrence (padded weight rows/cols and bias are zero).
    Hp = max(128, ((H + 127) // 128) * 128)

    # Batch sharding (parallel grid axis; 2nd TensorCore on v7x) + sublane pad.
    NS = max(1, int(batch_shards))
    Bc = -(-B // NS)
    Bc = max(8, ((Bc + 7) // 8) * 8)        # per-shard batch, multiple of 8
    Bp = NS * Bc

    # Time blocking (pad T to a multiple of TT; padded steps are discarded).
    TT = max(1, int(time_block))
    NB = -(-T // TT)
    Tp = NB * TT

    cdt = jnp.dtype(compute_dtype)
    wih_s = jnp.zeros((I, Hp), cdt).at[:, :H].set(
        (alpha * weight_ih.T.astype(f32)).astype(cdt))
    whh_s = jnp.zeros((Hp, Hp), cdt).at[:H, :H].set(
        (alpha * weight_hh.T.astype(f32)).astype(cdt))
    b_s = jnp.zeros((1, Hp), f32).at[:, :H].set(alpha * bias.astype(f32))
    h0 = jnp.zeros((Bp, Hp), f32).at[:B, :H].set(hidden_init[0].astype(f32))

    xp = jnp.zeros((Tp, Bp, I), cdt).at[:T, :B, :].set(x.astype(cdt))
    x_blk = xp.reshape(NB, TT, Bp, I)

    # Explicit VMEM budget: double-buffered x/out blocks + resident weights
    # (worst case double-buffered) + scratch, with headroom.
    cs, osz = cdt.itemsize, jnp.dtype(out_dtype).itemsize
    vmem_need = (2 * TT * Bc * I * cs                     # x block (x2 buffers)
                 + 2 * TT * Bc * Hp * osz                 # out block (x2 buffers)
                 + 2 * (I * Hp + Hp * Hp) * cs            # weights
                 + 2 * (Hp * 4 + Bc * Hp * 4)             # bias + h0
                 + TT * Bc * Hp * 4 + Bc * Hp * 4)        # scratch
    vmem_limit = int(min(max(int(1.5 * vmem_need) + (4 << 20), 16 << 20),
                         96 << 20))

    kernel = functools.partial(_rnn_kernel, decay=float(decay), tt=TT)

    def _run(resident_mode):
        def cspec(shape, index_map):
            if resident_mode is None:
                return pl.BlockSpec(shape, index_map)
            return pl.BlockSpec(shape, index_map, pipeline_mode=resident_mode)

        grid_spec = pltpu.PrefetchScalarGridSpec(
            num_scalar_prefetch=0,
            grid=(NS, NB),                      # (parallel batch shard, time)
            in_specs=[
                pl.BlockSpec((1, TT, Bc, I), lambda c, tb: (tb, 0, c, 0)),
                cspec((I, Hp), lambda c, tb: (0, 0)),    # W_ih^T (resident)
                cspec((Hp, Hp), lambda c, tb: (0, 0)),   # W_hh^T (resident)
                cspec((1, Hp), lambda c, tb: (0, 0)),    # bias
                cspec((Bc, Hp), lambda c, tb: (c, 0)),   # hidden_init shard
            ],
            out_specs=pl.BlockSpec((1, TT, Bc, Hp), lambda c, tb: (tb, 0, c, 0)),
            scratch_shapes=[pltpu.VMEM((TT, Bc, Hp), jnp.float32),  # staged u
                            pltpu.VMEM((Bc, Hp), jnp.float32)],     # h carry
        )
        return pl.pallas_call(
            kernel,
            out_shape=jax.ShapeDtypeStruct((NB, TT, Bp, Hp), out_dtype),
            grid_spec=grid_spec,
            compiler_params=pltpu.CompilerParams(
                dimension_semantics=("parallel", "arbitrary"),
                vmem_limit_bytes=vmem_limit),
        )(x_blk, wih_s, whh_s, b_s, h0)

    try:
        # Single-buffer the constant-index resident operands.
        out_blk = _run(pl.Buffered(1))
    except Exception:
        # Fallback: default (double-buffered) specs — correctness identical.
        out_blk = _run(None)

    outputs = out_blk.reshape(Tp, Bp, Hp)[:T, :B, :H]
    return outputs, outputs[-1]


def _reference(x, hidden_init, weight_ih, weight_hh, bias, decay=0.9):
    """Pure-JAX reference mirroring the PyTorch loop exactly (f32)."""
    h = hidden_init[0]
    outs = []
    for t in range(x.shape[0]):
        pre = x[t] @ weight_ih.T + h @ weight_hh.T + bias
        act = jnp.maximum(pre, 0.0)
        h = decay * h + (1.0 - decay) * act
        outs.append(h)
    return jnp.stack(outs), h


if __name__ == "__main__":
    # Small shapes consistent with the module: seq=12, batch=2, input=4,
    # hidden=16 (perfect square, per the coords assertion).
    T, B, I, H = 12, 2, 4, 16
    decay = 0.9

    key = jax.random.PRNGKey(0)
    k_x, k_h0, k_wih, k_whh, k_b = jax.random.split(key, 5)

    # Deterministic parameter init matching reset_parameters():
    #   kaiming_uniform_(a=sqrt(5)) -> U(-1/sqrt(fan_in), 1/sqrt(fan_in))
    bound_ih = 1.0 / (I ** 0.5)
    bound_hh = 1.0 / (H ** 0.5)
    weight_ih = jax.random.uniform(k_wih, (H, I), jnp.float32, -bound_ih, bound_ih)
    weight_hh = jax.random.uniform(k_whh, (H, H), jnp.float32, -bound_hh, bound_hh)
    bias = jax.random.uniform(k_b, (H,), jnp.float32, -bound_ih, bound_ih)

    x = jax.random.normal(k_x, (T, B, I), jnp.float32)
    hidden_init = jax.random.normal(k_h0, (1, B, H), jnp.float32)

    ref_out, ref_h = _reference(x, hidden_init, weight_ih, weight_hh, bias, decay)

    # 1) f32 compute path (bit-accurate vs the reference); time_block=8 so the
    #    multi-block hidden carry and time padding (12 -> 16) are exercised.
    out32, h32 = rnn_layer_forward(x, hidden_init, weight_ih, weight_hh, bias,
                                   decay, time_block=8, batch_shards=1,
                                   compute_dtype=jnp.float32)
    jax.block_until_ready((out32, h32))
    assert out32.shape == (T, B, H) and h32.shape == (B, H)
    assert jnp.allclose(out32, ref_out, atol=1e-4, rtol=1e-4)
    assert jnp.allclose(h32, ref_h, atol=1e-4, rtol=1e-4)

    # 2) Default perf path: bf16 MXU operands (f32 accumulation / f32 carry)
    #    and a 2-way parallel batch-shard axis (uses both TCs on v7x; runs
    #    sequentially on v5e/v6e). Tolerance reflects bf16 operand rounding.
    outbf, hbf = rnn_layer_forward(x, hidden_init, weight_ih, weight_hh, bias,
                                   decay, time_block=8, batch_shards=2,
                                   compute_dtype=jnp.bfloat16)
    jax.block_until_ready((outbf, hbf))
    assert outbf.shape == (T, B, H) and hbf.shape == (B, H)
    assert jnp.allclose(outbf, ref_out, atol=3e-2, rtol=3e-2)
    assert jnp.allclose(hbf, ref_h, atol=3e-2, rtol=3e-2)

    print("KERNEL_OK")
</pallas_src>

<mosaic_0001>
module attributes {stable_mosaic.version = 11 : i64} {
  func.func @_rnn_kernel(%arg0: i32, %arg1: i32, %arg2: memref<1x8x8x4xf32, #tpu.memory_space<vmem>>, %arg3: memref<4x128xf32, #tpu.memory_space<vmem>>, %arg4: memref<128x128xf32, #tpu.memory_space<vmem>>, %arg5: memref<1x128xf32, #tpu.memory_space<vmem>>, %arg6: memref<8x128xf32, #tpu.memory_space<vmem>>, %arg7: memref<1x8x8x128xf32, #tpu.memory_space<vmem>>, %arg8: memref<8x8x128xf32, #tpu.memory_space<vmem>>, %arg9: memref<8x128xf32, #tpu.memory_space<vmem>>) attributes {dimension_semantics = [#tpu.dimension_semantics<parallel>, #tpu.dimension_semantics<arbitrary>], iteration_bounds = array<i64: 1, 2>, scalar_prefetch = 0 : i64, scratch_operands = 2 : i64, tpu.core_type = #tpu.core_type<tc>, window_params = [{transform_indices = @transform_0, window_bounds = array<i64: 1, 8, 8, 4>}, {pipeline_mode = #tpu.pipeline_mode<synchronous>, transform_indices = @transform_1, window_bounds = array<i64: 4, 128>}, {pipeline_mode = #tpu.pipeline_mode<synchronous>, transform_indices = @transform_2, window_bounds = array<i64: 128, 128>}, {pipeline_mode = #tpu.pipeline_mode<synchronous>, transform_indices = @transform_3, window_bounds = array<i64: 1, 128>}, {pipeline_mode = #tpu.pipeline_mode<synchronous>, transform_indices = @transform_4, window_bounds = array<i64: 8, 128>}, {transform_indices = @transform_5, window_bounds = array<i64: 1, 8, 8, 128>}]} {
    %c0_i32 = arith.constant 0 : i32
    %0 = arith.cmpi eq, %arg1, %c0_i32 : i32
    %1 = arith.extui %0 : i1 to i32
    %c0_i32_0 = arith.constant 0 : i32
    %2 = arith.cmpi ne, %1, %c0_i32_0 : i32
    scf.if %2 {
      %c0_82 = arith.constant 0 : index
      %c0_83 = arith.constant 0 : index
      %128 = vector.load %arg6[%c0_82, %c0_83] : memref<8x128xf32, #tpu.memory_space<vmem>>, vector<8x128xf32>
      %c0_84 = arith.constant 0 : index
      %c0_85 = arith.constant 0 : index
      %129 = vector.load %arg9[%c0_84, %c0_85] : memref<8x128xf32, #tpu.memory_space<vmem>>, vector<8x128xf32>
      tpu.vector_store %arg9[%c0_84, %c0_85], %128 {strides = array<i32>} : memref<8x128xf32, #tpu.memory_space<vmem>>, vector<8x128xf32>,
    } else {
    }
    %c0 = arith.constant 0 : index
    %c0_1 = arith.constant 0 : index
    %c0_2 = arith.constant 0 : index
    %c0_3 = arith.constant 0 : index
    %3 = vector.load %arg2[%c0, %c0_1, %c0_2, %c0_3] : memref<1x8x8x4xf32, #tpu.memory_space<vmem>>, vector<1x8x8x4xf32>
    %4 = vector.shape_cast %3 : vector<1x8x8x4xf32> to vector<8x8x4xf32>
    %5 = vector.shape_cast %4 : vector<8x8x4xf32> to vector<64x4xf32>
    %c0_4 = arith.constant 0 : index
    %c0_5 = arith.constant 0 : index
    %6 = vector.load %arg3[%c0_4, %c0_5] : memref<4x128xf32, #tpu.memory_space<vmem>>, vector<4x128xf32>
    %cst = arith.constant dense<0.000000e+00> : vector<64x128xf32>
    %7 = tpu.matmul %5, %6, %cst {dimension_numbers = #tpu.dot_dimension_numbers<[1], [0], [0], [1], [0, 0, 1, 1], [], []>} : vector<64x4xf32>, vector<4x128xf32>, vector<64x128xf32> -> vector<64x128xf32>
    %c0_6 = arith.constant 0 : index
    %c0_7 = arith.constant 0 : index
    %8 = vector.load %arg5[%c0_6, %c0_7] : memref<1x128xf32, #tpu.memory_space<vmem>>, vector<1x128xf32>
    %9 = vector.broadcast %8 : vector<1x128xf32> to vector<64x128xf32>
    %10 = arith.addf %7, %9 : vector<64x128xf32>
    %11 = vector.shape_cast %10 : vector<64x128xf32> to vector<8x8x128xf32>
    %c0_8 = arith.constant 0 : index
    %c0_9 = arith.constant 0 : index
    %c0_10 = arith.constant 0 : index
    %12 = vector.load %arg8[%c0_8, %c0_9, %c0_10] : memref<8x8x128xf32, #tpu.memory_space<vmem>>, vector<8x8x128xf32>
    tpu.vector_store %arg8[%c0_8, %c0_9, %c0_10], %11 {strides = array<i32>} : memref<8x8x128xf32, #tpu.memory_space<vmem>>, vector<8x8x128xf32>,
    %c0_11 = arith.constant 0 : index
    %c0_12 = arith.constant 0 : index
    %13 = vector.load %arg4[%c0_11, %c0_12] : memref<128x128xf32, #tpu.memory_space<vmem>>, vector<128x128xf32>
    %c0_13 = arith.constant 0 : index
    %c0_14 = arith.constant 0 : index
    %14 = vector.load %arg9[%c0_13, %c0_14] : memref<8x128xf32, #tpu.memory_space<vmem>>, vector<8x128xf32>
    %c0_i32_15 = arith.constant 0 : i32
    %15 = arith.index_cast %c0_i32_15 : i32 to index
    %c0_16 = arith.constant 0 : index
    %c0_17 = arith.constant 0 : index
    %16 = vector.load %arg8[%15, %c0_16, %c0_17] : memref<8x8x128xf32, #tpu.memory_space<vmem>>, vector<1x8x128xf32>
    %17 = vector.shape_cast %16 : vector<1x8x128xf32> to vector<8x128xf32>
    %cst_18 = arith.constant dense<0.000000e+00> : vector<8x128xf32>
    %18 = tpu.matmul %14, %13, %cst_18 {dimension_numbers = #tpu.dot_dimension_numbers<[1], [0], [0], [1], [0, 0, 1, 1], [], []>} : vector<8x128xf32>, vector<128x128xf32>, vector<8x128xf32> -> vector<8x128xf32>
    %19 = arith.addf %17, %18 : vector<8x128xf32>
    %cst_19 = arith.constant 0.899999976 : f32
    %20 = vector.broadcast %cst_19 : f32 to vector<8x128xf32>
    %21 = arith.mulf %20, %14 : vector<8x128xf32>
    %cst_20 = arith.constant 0.000000e+00 : f32
    %22 = vector.broadcast %cst_20 : f32 to vector<8x128xf32>
    %23 = arith.maximumf %19, %22 : vector<8x128xf32>
    %24 = arith.addf %21, %23 : vector<8x128xf32>
    %c0_21 = arith.constant 0 : index
    %25 = arith.index_cast %c0_i32_15 : i32 to index
    %c0_22 = arith.constant 0 : index
    %c0_23 = arith.constant 0 : index
    %26 = vector.load %arg7[%c0_21, %25, %c0_22, %c0_23] : memref<1x8x8x128xf32, #tpu.memory_space<vmem>>, vector<1x1x8x128xf32>
    %27 = vector.shape_cast %26 : vector<1x1x8x128xf32> to vector<8x128xf32>
    %28 = vector.shape_cast %24 : vector<8x128xf32> to vector<1x1x8x128xf32>
    tpu.vector_store %arg7[%c0_21, %25, %c0_22, %c0_23], %28 {strides = array<i32>} : memref<1x8x8x128xf32, #tpu.memory_space<vmem>>, vector<1x1x8x128xf32>,
    %c1_i32 = arith.constant 1 : i32
    %29 = arith.index_cast %c1_i32 : i32 to index
    %c0_24 = arith.constant 0 : index
    %c0_25 = arith.constant 0 : index
    %30 = vector.load %arg8[%29, %c0_24, %c0_25] : memref<8x8x128xf32, #tpu.memory_space<vmem>>, vector<1x8x128xf32>
    %31 = vector.shape_cast %30 : vector<1x8x128xf32> to vector<8x128xf32>
    %cst_26 = arith.constant dense<0.000000e+00> : vector<8x128xf32>
    %32 = tpu.matmul %24, %13, %cst_26 {dimension_numbers = #tpu.dot_dimension_numbers<[1], [0], [0], [1], [0, 0, 1, 1], [], []>} : vector<8x128xf32>, vector<128x128xf32>, vector<8x128xf32> -> vector<8x128xf32>
    %33 = arith.addf %31, %32 : vector<8x128xf32>
    %cst_27 = arith.constant 0.899999976 : f32
    %34 = vector.broadcast %cst_27 : f32 to vector<8x128xf32>
    %35 = arith.mulf %34, %24 : vector<8x128xf32>
    %cst_28 = arith.constant 0.000000e+00 : f32
    %36 = vector.broadcast %cst_28 : f32 to vector<8x128xf32>
    %37 = arith.maximumf %33, %36 : vector<8x128xf32>
    %38 = arith.addf %35, %37 : vector<8x128xf32>
    %c0_29 = arith.constant 0 : index
    %39 = arith.index_cast %c1_i32 : i32 to index
    %c0_30 = arith.constant 0 : index
    %c0_31 = arith.constant 0 : index
    %40 = vector.load %arg7[%c0_29, %39, %c0_30, %c0_31] : memref<1x8x8x128xf32, #tpu.memory_space<vmem>>, vector<1x1x8x128xf32>
    %41 = vector.shape_cast %40 : vector<1x1x8x128xf32> to vector<8x128xf32>
    %42 = vector.shape_cast %38 : vector<8x128xf32> to vector<1x1x8x128xf32>
    tpu.vector_store %arg7[%c0_29, %39, %c0_30, %c0_31], %42 {strides = array<i32>} : memref<1x8x8x128xf32, #tpu.memory_space<vmem>>, vector<1x1x8x128xf32>,
    %c2_i32 = arith.constant 2 : i32
    %43 = arith.index_cast %c2_i32 : i32 to index
    %c0_32 = arith.constant 0 : index
    %c0_33 = arith.constant 0 : index
    %44 = vector.load %arg8[%43, %c0_32, %c0_33] : memref<8x8x128xf32, #tpu.memory_space<vmem>>, vector<1x8x128xf32>
    %45 = vector.shape_cast %44 : vector<1x8x128xf32> to vector<8x128xf32>
    %cst_34 = arith.constant dense<0.000000e+00> : vector<8x128xf32>
    %46 = tpu.matmul %38, %13, %cst_34 {dimension_numbers = #tpu.dot_dimension_numbers<[1], [0], [0], [1], [0, 0, 1, 1], [], []>} : vector<8x128xf32>, vector<128x128xf32>, vector<8x128xf32> -> vector<8x128xf32>
    %47 = arith.addf %45, %46 : vector<8x128xf32>
    %cst_35 = arith.constant 0.899999976 : f32
    %48 = vector.broadcast %cst_35 : f32 to vector<8x128xf32>
    %49 = arith.mulf %48, %38 : vector<8x128xf32>
    %cst_36 = arith.constant 0.000000e+00 : f32
    %50 = vector.broadcast %cst_36 : f32 to vector<8x128xf32>
    %51 = arith.maximumf %47, %50 : vector<8x128xf32>
    %52 = arith.addf %49, %51 : vector<8x128xf32>
    %c0_37 = arith.constant 0 : index
    %53 = arith.index_cast %c2_i32 : i32 to index
    %c0_38 = arith.constant 0 : index
    %c0_39 = arith.constant 0 : index
    %54 = vector.load %arg7[%c0_37, %53, %c0_38, %c0_39] : memref<1x8x8x128xf32, #tpu.memory_space<vmem>>, vector<1x1x8x128xf32>
    %55 = vector.shape_cast %54 : vector<1x1x8x128xf32> to vector<8x128xf32>
    %56 = vector.shape_cast %52 : vector<8x128xf32> to vector<1x1x8x128xf32>
    tpu.vector_store %arg7[%c0_37, %53, %c0_38, %c0_39], %56 {strides = array<i32>} : memref<1x8x8x128xf32, #tpu.memory_space<vmem>>, vector<1x1x8x128xf32>,
    %c3_i32 = arith.constant 3 : i32
    %57 = arith.index_cast %c3_i32 : i32 to index
    %c0_40 = arith.constant 0 : index
    %c0_41 = arith.constant 0 : index
    %58 = vector.load %arg8[%57, %c0_40, %c0_41] : memref<8x8x128xf32, #tpu.memory_space<vmem>>, vector<1x8x128xf32>
    %59 = vector.shape_cast %58 : vector<1x8x128xf32> to vector<8x128xf32>
    %cst_42 = arith.constant dense<0.000000e+00> : vector<8x128xf32>
    %60 = tpu.matmul %52, %13, %cst_42 {dimension_numbers = #tpu.dot_dimension_numbers<[1], [0], [0], [1], [0, 0, 1, 1], [], []>} : vector<8x128xf32>, vector<128x128xf32>, vector<8x128xf32> -> vector<8x128xf32>
    %61 = arith.addf %59, %60 : vector<8x128xf32>
    %cst_43 = arith.constant 0.899999976 : f32
    %62 = vector.broadcast %cst_43 : f32 to vector<8x128xf32>
    %63 = arith.mulf %62, %52 : vector<8x128xf32>
    %cst_44 = arith.constant 0.000000e+00 : f32
    %64 = vector.broadcast %cst_44 : f32 to vector<8x128xf32>
    %65 = arith.maximumf %61, %64 : vector<8x128xf32>
    %66 = arith.addf %63, %65 : vector<8x128xf32>
    %c0_45 = arith.constant 0 : index
    %67 = arith.index_cast %c3_i32 : i32 to index
    %c0_46 = arith.constant 0 : index
    %c0_47 = arith.constant 0 : index
    %68 = vector.load %arg7[%c0_45, %67, %c0_46, %c0_47] : memref<1x8x8x128xf32, #tpu.memory_space<vmem>>, vector<1x1x8x128xf32>
    %69 = vector.shape_cast %68 : vector<1x1x8x128xf32> to vector<8x128xf32>
    %70 = vector.shape_cast %66 : vector<8x128xf32> to vector<1x1x8x128xf32>
    tpu.vector_store %arg7[%c0_45, %67, %c0_46, %c0_47], %70 {strides = array<i32>} : memref<1x8x8x128xf32, #tpu.memory_space<vmem>>, vector<1x1x8x128xf32>,
    %c4_i32 = arith.constant 4 : i32
    %71 = arith.index_cast %c4_i32 : i32 to index
    %c0_48 = arith.constant 0 : index
    %c0_49 = arith.constant 0 : index
    %72 = vector.load %arg8[%71, %c0_48, %c0_49] : memref<8x8x128xf32, #tpu.memory_space<vmem>>, vector<1x8x128xf32>
    %73 = vector.shape_cast %72 : vector<1x8x128xf32> to vector<8x128xf32>
    %cst_50 = arith.constant dense<0.000000e+00> : vector<8x128xf32>
    %74 = tpu.matmul %66, %13, %cst_50 {dimension_numbers = #tpu.dot_dimension_numbers<[1], [0], [0], [1], [0, 0, 1, 1], [], []>} : vector<8x128xf32>, vector<128x128xf32>, vector<8x128xf32> -> vector<8x128xf32>
    %75 = arith.addf %73, %74 : vector<8x128xf32>
    %cst_51 = arith.constant 0.899999976 : f32
    %76 = vector.broadcast %cst_51 : f32 to vector<8x128xf32>
    %77 = arith.mulf %76, %66 : vector<8x128xf32>
    %cst_52 = arith.constant 0.000000e+00 : f32
    %78 = vector.broadcast %cst_52 : f32 to vector<8x128xf32>
    %79 = arith.maximumf %75, %78 : vector<8x128xf32>
    %80 = arith.addf %77, %79 : vector<8x128xf32>
    %c0_53 = arith.constant 0 : index
    %81 = arith.index_cast %c4_i32 : i32 to index
    %c0_54 = arith.constant 0 : index
    %c0_55 = arith.constant 0 : index
    %82 = vector.load %arg7[%c0_53, %81, %c0_54, %c0_55] : memref<1x8x8x128xf32, #tpu.memory_space<vmem>>, vector<1x1x8x128xf32>
    %83 = vector.shape_cast %82 : vector<1x1x8x128xf32> to vector<8x128xf32>
    %84 = vector.shape_cast %80 : vector<8x128xf32> to vector<1x1x8x128xf32>
    tpu.vector_store %arg7[%c0_53, %81, %c0_54, %c0_55], %84 {strides = array<i32>} : memref<1x8x8x128xf32, #tpu.memory_space<vmem>>, vector<1x1x8x128xf32>,
    %c5_i32 = arith.constant 5 : i32
    %85 = arith.index_cast %c5_i32 : i32 to index
    %c0_56 = arith.constant 0 : index
    %c0_57 = arith.constant 0 : index
    %86 = vector.load %arg8[%85, %c0_56, %c0_57] : memref<8x8x128xf32, #tpu.memory_space<vmem>>, vector<1x8x128xf32>
    %87 = vector.shape_cast %86 : vector<1x8x128xf32> to vector<8x128xf32>
    %cst_58 = arith.constant dense<0.000000e+00> : vector<8x128xf32>
    %88 = tpu.matmul %80, %13, %cst_58 {dimension_numbers = #tpu.dot_dimension_numbers<[1], [0], [0], [1], [0, 0, 1, 1], [], []>} : vector<8x128xf32>, vector<128x128xf32>, vector<8x128xf32> -> vector<8x128xf32>
    %89 = arith.addf %87, %88 : vector<8x128xf32>
    %cst_59 = arith.constant 0.899999976 : f32
    %90 = vector.broadcast %cst_59 : f32 to vector<8x128xf32>
    %91 = arith.mulf %90, %80 : vector<8x128xf32>
    %cst_60 = arith.constant 0.000000e+00 : f32
    %92 = vector.broadcast %cst_60 : f32 to vector<8x128xf32>
    %93 = arith.maximumf %89, %92 : vector<8x128xf32>
    %94 = arith.addf %91, %93 : vector<8x128xf32>
    %c0_61 = arith.constant 0 : index
    %95 = arith.index_cast %c5_i32 : i32 to index
    %c0_62 = arith.constant 0 : index
    %c0_63 = arith.constant 0 : index
    %96 = vector.load %arg7[%c0_61, %95, %c0_62, %c0_63] : memref<1x8x8x128xf32, #tpu.memory_space<vmem>>, vector<1x1x8x128xf32>
    %97 = vector.shape_cast %96 : vector<1x1x8x128xf32> to vector<8x128xf32>
    %98 = vector.shape_cast %94 : vector<8x128xf32> to vector<1x1x8x128xf32>
    tpu.vector_store %arg7[%c0_61, %95, %c0_62, %c0_63], %98 {strides = array<i32>} : memref<1x8x8x128xf32, #tpu.memory_space<vmem>>, vector<1x1x8x128xf32>,
    %c6_i32 = arith.constant 6 : i32
    %99 = arith.index_cast %c6_i32 : i32 to index
    %c0_64 = arith.constant 0 : index
    %c0_65 = arith.constant 0 : index
    %100 = vector.load %arg8[%99, %c0_64, %c0_65] : memref<8x8x128xf32, #tpu.memory_space<vmem>>, vector<1x8x128xf32>
    %101 = vector.shape_cast %100 : vector<1x8x128xf32> to vector<8x128xf32>
    %cst_66 = arith.constant dense<0.000000e+00> : vector<8x128xf32>
    %102 = tpu.matmul %94, %13, %cst_66 {dimension_numbers = #tpu.dot_dimension_numbers<[1], [0], [0], [1], [0, 0, 1, 1], [], []>} : vector<8x128xf32>, vector<128x128xf32>, vector<8x128xf32> -> vector<8x128xf32>
    %103 = arith.addf %101, %102 : vector<8x128xf32>
    %cst_67 = arith.constant 0.899999976 : f32
    %104 = vector.broadcast %cst_67 : f32 to vector<8x128xf32>
    %105 = arith.mulf %104, %94 : vector<8x128xf32>
    %cst_68 = arith.constant 0.000000e+00 : f32
    %106 = vector.broadcast %cst_68 : f32 to vector<8x128xf32>
    %107 = arith.maximumf %103, %106 : vector<8x128xf32>
    %108 = arith.addf %105, %107 : vector<8x128xf32>
    %c0_69 = arith.constant 0 : index
    %109 = arith.index_cast %c6_i32 : i32 to index
    %c0_70 = arith.constant 0 : index
    %c0_71 = arith.constant 0 : index
    %110 = vector.load %arg7[%c0_69, %109, %c0_70, %c0_71] : memref<1x8x8x128xf32, #tpu.memory_space<vmem>>, vector<1x1x8x128xf32>
    %111 = vector.shape_cast %110 : vector<1x1x8x128xf32> to vector<8x128xf32>
    %112 = vector.shape_cast %108 : vector<8x128xf32> to vector<1x1x8x128xf32>
    tpu.vector_store %arg7[%c0_69, %109, %c0_70, %c0_71], %112 {strides = array<i32>} : memref<1x8x8x128xf32, #tpu.memory_space<vmem>>, vector<1x1x8x128xf32>,
    %c7_i32 = arith.constant 7 : i32
    %113 = arith.index_cast %c7_i32 : i32 to index
    %c0_72 = arith.constant 0 : index
    %c0_73 = arith.constant 0 : index
    %114 = vector.load %arg8[%113, %c0_72, %c0_73] : memref<8x8x128xf32, #tpu.memory_space<vmem>>, vector<1x8x128xf32>
    %115 = vector.shape_cast %114 : vector<1x8x128xf32> to vector<8x128xf32>
    %cst_74 = arith.constant dense<0.000000e+00> : vector<8x128xf32>
    %116 = tpu.matmul %108, %13, %cst_74 {dimension_numbers = #tpu.dot_dimension_numbers<[1], [0], [0], [1], [0, 0, 1, 1], [], []>} : vector<8x128xf32>, vector<128x128xf32>, vector<8x128xf32> -> vector<8x128xf32>
    %117 = arith.addf %115, %116 : vector<8x128xf32>
    %cst_75 = arith.constant 0.899999976 : f32
    %118 = vector.broadcast %cst_75 : f32 to vector<8x128xf32>
    %119 = arith.mulf %118, %108 : vector<8x128xf32>
    %cst_76 = arith.constant 0.000000e+00 : f32
    %120 = vector.broadcast %cst_76 : f32 to vector<8x128xf32>
    %121 = arith.maximumf %117, %120 : vector<8x128xf32>
    %122 = arith.addf %119, %121 : vector<8x128xf32>
    %c0_77 = arith.constant 0 : index
    %123 = arith.index_cast %c7_i32 : i32 to index
    %c0_78 = arith.constant 0 : index
    %c0_79 = arith.constant 0 : index
    %124 = vector.load %arg7[%c0_77, %123, %c0_78, %c0_79] : memref<1x8x8x128xf32, #tpu.memory_space<vmem>>, vector<1x1x8x128xf32>
    %125 = vector.shape_cast %124 : vector<1x1x8x128xf32> to vector<8x128xf32>
    %126 = vector.shape_cast %122 : vector<8x128xf32> to vector<1x1x8x128xf32>
    tpu.vector_store %arg7[%c0_77, %123, %c0_78, %c0_79], %126 {strides = array<i32>} : memref<1x8x8x128xf32, #tpu.memory_space<vmem>>, vector<1x1x8x128xf32>,
    %c8_i32 = arith.constant 8 : i32
    %c0_80 = arith.constant 0 : index
    %c0_81 = arith.constant 0 : index
    %127 = vector.load %arg9[%c0_80, %c0_81] : memref<8x128xf32, #tpu.memory_space<vmem>>, vector<8x128xf32>
    tpu.vector_store %arg9[%c0_80, %c0_81], %122 {strides = array<i32>} : memref<8x128xf32, #tpu.memory_space<vmem>>, vector<8x128xf32>,
    return
  }
  func.func @transform_0(%arg0: i32, %arg1: i32) -> (i32, i32, i32, i32) {
    %c0_i32 = arith.constant 0 : i32
    %c0_i32_0 = arith.constant 0 : i32
    %c0_i32_1 = arith.constant 0 : i32
    return %arg1, %c0_i32, %arg0, %c0_i32_0 : i32, i32, i32, i32
  }
  func.func @transform_1(%arg0: i32, %arg1: i32) -> (i32, i32) {
    %c0_i32 = arith.constant 0 : i32
    %c0_i32_0 = arith.constant 0 : i32
    %c0_i32_1 = arith.constant 0 : i32
    return %c0_i32, %c0_i32_0 : i32, i32
  }
  func.func @transform_2(%arg0: i32, %arg1: i32) -> (i32, i32) {
    %c0_i32 = arith.constant 0 : i32
    %c0_i32_0 = arith.constant 0 : i32
    %c0_i32_1 = arith.constant 0 : i32
    return %c0_i32, %c0_i32_0 : i32, i32
  }
  func.func @transform_3(%arg0: i32, %arg1: i32) -> (i32, i32) {
    %c0_i32 = arith.constant 0 : i32
    %c0_i32_0 = arith.constant 0 : i32
    %c0_i32_1 = arith.constant 0 : i32
    return %c0_i32, %c0_i32_0 : i32, i32
  }
  func.func @transform_4(%arg0: i32, %arg1: i32) -> (i32, i32) {
    %c0_i32 = arith.constant 0 : i32
    %c0_i32_0 = arith.constant 0 : i32
    return %arg0, %c0_i32 : i32, i32
  }
  func.func @transform_5(%arg0: i32, %arg1: i32) -> (i32, i32, i32, i32) {
    %c0_i32 = arith.constant 0 : i32
    %c0_i32_0 = arith.constant 0 : i32
    %c0_i32_1 = arith.constant 0 : i32
    return %arg1, %c0_i32, %arg0, %c0_i32_0 : i32, i32, i32, i32
  }
}

module attributes {stable_mosaic.version = 11 : i64} {
  func.func @_rnn_kernel(%arg0: i32, %arg1: i32, %arg2: memref<1x8x8x4xf32, #tpu.memory_space<vmem>>, %arg3: memref<4x128xf32, #tpu.memory_space<vmem>>, %arg4: memref<128x128xf32, #tpu.memory_space<vmem>>, %arg5: memref<1x128xf32, #tpu.memory_space<vmem>>, %arg6: memref<8x128xf32, #tpu.memory_space<vmem>>, %arg7: memref<1x8x8x128xf32, #tpu.memory_space<vmem>>, %arg8: memref<8x8x128xf32, #tpu.memory_space<vmem>>, %arg9: memref<8x128xf32, #tpu.memory_space<vmem>>) attributes {dimension_semantics = [#tpu.dimension_semantics<parallel>, #tpu.dimension_semantics<arbitrary>], iteration_bounds = array<i64: 1, 2>, scalar_prefetch = 0 : i64, scratch_operands = 2 : i64, tpu.core_type = #tpu.core_type<tc>, window_params = [{transform_indices = @transform_0, window_bounds = array<i64: 1, 8, 8, 4>}, {pipeline_mode = #tpu.pipeline_mode<synchronous>, transform_indices = @transform_1, window_bounds = array<i64: 4, 128>}, {pipeline_mode = #tpu.pipeline_mode<synchronous>, transform_indices = @transform_2, window_bounds = array<i64: 128, 128>}, {pipeline_mode = #tpu.pipeline_mode<synchronous>, transform_indices = @transform_3, window_bounds = array<i64: 1, 128>}, {transform_indices = @transform_4, window_bounds = array<i64: 8, 128>}, {transform_indices = @transform_5, window_bounds = array<i64: 1, 8, 8, 128>}]} {
    %c0_i32 = arith.constant 0 : i32
    %0 = arith.cmpi eq, %arg1, %c0_i32 : i32
    %1 = arith.extui %0 : i1 to i32
    %c0_i32_0 = arith.constant 0 : i32
    %2 = arith.cmpi ne, %1, %c0_i32_0 : i32
    scf.if %2 {
      %c0_82 = arith.constant 0 : index
      %c0_83 = arith.constant 0 : index
      %128 = vector.load %arg6[%c0_82, %c0_83] : memref<8x128xf32, #tpu.memory_space<vmem>>, vector<8x128xf32>
      %c0_84 = arith.constant 0 : index
      %c0_85 = arith.constant 0 : index
      %129 = vector.load %arg9[%c0_84, %c0_85] : memref<8x128xf32, #tpu.memory_space<vmem>>, vector<8x128xf32>
      tpu.vector_store %arg9[%c0_84, %c0_85], %128 {strides = array<i32>} : memref<8x128xf32, #tpu.memory_space<vmem>>, vector<8x128xf32>,
    } else {
    }
    %c0 = arith.constant 0 : index
    %c0_1 = arith.constant 0 : index
    %c0_2 = arith.constant 0 : index
    %c0_3 = arith.constant 0 : index
    %3 = vector.load %arg2[%c0, %c0_1, %c0_2, %c0_3] : memref<1x8x8x4xf32, #tpu.memory_space<vmem>>, vector<1x8x8x4xf32>
    %4 = vector.shape_cast %3 : vector<1x8x8x4xf32> to vector<8x8x4xf32>
    %5 = vector.shape_cast %4 : vector<8x8x4xf32> to vector<64x4xf32>
    %c0_4 = arith.constant 0 : index
    %c0_5 = arith.constant 0 : index
    %6 = vector.load %arg3[%c0_4, %c0_5] : memref<4x128xf32, #tpu.memory_space<vmem>>, vector<4x128xf32>
    %cst = arith.constant dense<0.000000e+00> : vector<64x128xf32>
    %7 = tpu.matmul %5, %6, %cst {dimension_numbers = #tpu.dot_dimension_numbers<[1], [0], [0], [1], [0, 0, 1, 1], [], []>} : vector<64x4xf32>, vector<4x128xf32>, vector<64x128xf32> -> vector<64x128xf32>
    %c0_6 = arith.constant 0 : index
    %c0_7 = arith.constant 0 : index
    %8 = vector.load %arg5[%c0_6, %c0_7] : memref<1x128xf32, #tpu.memory_space<vmem>>, vector<1x128xf32>
    %9 = vector.broadcast %8 : vector<1x128xf32> to vector<64x128xf32>
    %10 = arith.addf %7, %9 : vector<64x128xf32>
    %11 = vector.shape_cast %10 : vector<64x128xf32> to vector<8x8x128xf32>
    %c0_8 = arith.constant 0 : index
    %c0_9 = arith.constant 0 : index
    %c0_10 = arith.constant 0 : index
    %12 = vector.load %arg8[%c0_8, %c0_9, %c0_10] : memref<8x8x128xf32, #tpu.memory_space<vmem>>, vector<8x8x128xf32>
    tpu.vector_store %arg8[%c0_8, %c0_9, %c0_10], %11 {strides = array<i32>} : memref<8x8x128xf32, #tpu.memory_space<vmem>>, vector<8x8x128xf32>,
    %c0_11 = arith.constant 0 : index
    %c0_12 = arith.constant 0 : index
    %13 = vector.load %arg4[%c0_11, %c0_12] : memref<128x128xf32, #tpu.memory_space<vmem>>, vector<128x128xf32>
    %c0_13 = arith.constant 0 : index
    %c0_14 = arith.constant 0 : index
    %14 = vector.load %arg9[%c0_13, %c0_14] : memref<8x128xf32, #tpu.memory_space<vmem>>, vector<8x128xf32>
    %c0_i32_15 = arith.constant 0 : i32
    %15 = arith.index_cast %c0_i32_15 : i32 to index
    %c0_16 = arith.constant 0 : index
    %c0_17 = arith.constant 0 : index
    %16 = vector.load %arg8[%15, %c0_16, %c0_17] : memref<8x8x128xf32, #tpu.memory_space<vmem>>, vector<1x8x128xf32>
    %17 = vector.shape_cast %16 : vector<1x8x128xf32> to vector<8x128xf32>
    %cst_18 = arith.constant dense<0.000000e+00> : vector<8x128xf32>
    %18 = tpu.matmul %14, %13, %cst_18 {dimension_numbers = #tpu.dot_dimension_numbers<[1], [0], [0], [1], [0, 0, 1, 1], [], []>} : vector<8x128xf32>, vector<128x128xf32>, vector<8x128xf32> -> vector<8x128xf32>
    %19 = arith.addf %17, %18 : vector<8x128xf32>
    %cst_19 = arith.constant 0.899999976 : f32
    %20 = vector.broadcast %cst_19 : f32 to vector<8x128xf32>
    %21 = arith.mulf %20, %14 : vector<8x128xf32>
    %cst_20 = arith.constant 0.000000e+00 : f32
    %22 = vector.broadcast %cst_20 : f32 to vector<8x128xf32>
    %23 = arith.maximumf %19, %22 : vector<8x128xf32>
    %24 = arith.addf %21, %23 : vector<8x128xf32>
    %c0_21 = arith.constant 0 : index
    %25 = arith.index_cast %c0_i32_15 : i32 to index
    %c0_22 = arith.constant 0 : index
    %c0_23 = arith.constant 0 : index
    %26 = vector.load %arg7[%c0_21, %25, %c0_22, %c0_23] : memref<1x8x8x128xf32, #tpu.memory_space<vmem>>, vector<1x1x8x128xf32>
    %27 = vector.shape_cast %26 : vector<1x1x8x128xf32> to vector<8x128xf32>
    %28 = vector.shape_cast %24 : vector<8x128xf32> to vector<1x1x8x128xf32>
    tpu.vector_store %arg7[%c0_21, %25, %c0_22, %c0_23], %28 {strides = array<i32>} : memref<1x8x8x128xf32, #tpu.memory_space<vmem>>, vector<1x1x8x128xf32>,
    %c1_i32 = arith.constant 1 : i32
    %29 = arith.index_cast %c1_i32 : i32 to index
    %c0_24 = arith.constant 0 : index
    %c0_25 = arith.constant 0 : index
    %30 = vector.load %arg8[%29, %c0_24, %c0_25] : memref<8x8x128xf32, #tpu.memory_space<vmem>>, vector<1x8x128xf32>
    %31 = vector.shape_cast %30 : vector<1x8x128xf32> to vector<8x128xf32>
    %cst_26 = arith.constant dense<0.000000e+00> : vector<8x128xf32>
    %32 = tpu.matmul %24, %13, %cst_26 {dimension_numbers = #tpu.dot_dimension_numbers<[1], [0], [0], [1], [0, 0, 1, 1], [], []>} : vector<8x128xf32>, vector<128x128xf32>, vector<8x128xf32> -> vector<8x128xf32>
    %33 = arith.addf %31, %32 : vector<8x128xf32>
    %cst_27 = arith.constant 0.899999976 : f32
    %34 = vector.broadcast %cst_27 : f32 to vector<8x128xf32>
    %35 = arith.mulf %34, %24 : vector<8x128xf32>
    %cst_28 = arith.constant 0.000000e+00 : f32
    %36 = vector.broadcast %cst_28 : f32 to vector<8x128xf32>
    %37 = arith.maximumf %33, %36 : vector<8x128xf32>
    %38 = arith.addf %35, %37 : vector<8x128xf32>
    %c0_29 = arith.constant 0 : index
    %39 = arith.index_cast %c1_i32 : i32 to index
    %c0_30 = arith.constant 0 : index
    %c0_31 = arith.constant 0 : index
    %40 = vector.load %arg7[%c0_29, %39, %c0_30, %c0_31] : memref<1x8x8x128xf32, #tpu.memory_space<vmem>>, vector<1x1x8x128xf32>
    %41 = vector.shape_cast %40 : vector<1x1x8x128xf32> to vector<8x128xf32>
    %42 = vector.shape_cast %38 : vector<8x128xf32> to vector<1x1x8x128xf32>
    tpu.vector_store %arg7[%c0_29, %39, %c0_30, %c0_31], %42 {strides = array<i32>} : memref<1x8x8x128xf32, #tpu.memory_space<vmem>>, vector<1x1x8x128xf32>,
    %c2_i32 = arith.constant 2 : i32
    %43 = arith.index_cast %c2_i32 : i32 to index
    %c0_32 = arith.constant 0 : index
    %c0_33 = arith.constant 0 : index
    %44 = vector.load %arg8[%43, %c0_32, %c0_33] : memref<8x8x128xf32, #tpu.memory_space<vmem>>, vector<1x8x128xf32>
    %45 = vector.shape_cast %44 : vector<1x8x128xf32> to vector<8x128xf32>
    %cst_34 = arith.constant dense<0.000000e+00> : vector<8x128xf32>
    %46 = tpu.matmul %38, %13, %cst_34 {dimension_numbers = #tpu.dot_dimension_numbers<[1], [0], [0], [1], [0, 0, 1, 1], [], []>} : vector<8x128xf32>, vector<128x128xf32>, vector<8x128xf32> -> vector<8x128xf32>
    %47 = arith.addf %45, %46 : vector<8x128xf32>
    %cst_35 = arith.constant 0.899999976 : f32
    %48 = vector.broadcast %cst_35 : f32 to vector<8x128xf32>
    %49 = arith.mulf %48, %38 : vector<8x128xf32>
    %cst_36 = arith.constant 0.000000e+00 : f32
    %50 = vector.broadcast %cst_36 : f32 to vector<8x128xf32>
    %51 = arith.maximumf %47, %50 : vector<8x128xf32>
    %52 = arith.addf %49, %51 : vector<8x128xf32>
    %c0_37 = arith.constant 0 : index
    %53 = arith.index_cast %c2_i32 : i32 to index
    %c0_38 = arith.constant 0 : index
    %c0_39 = arith.constant 0 : index
    %54 = vector.load %arg7[%c0_37, %53, %c0_38, %c0_39] : memref<1x8x8x128xf32, #tpu.memory_space<vmem>>, vector<1x1x8x128xf32>
    %55 = vector.shape_cast %54 : vector<1x1x8x128xf32> to vector<8x128xf32>
    %56 = vector.shape_cast %52 : vector<8x128xf32> to vector<1x1x8x128xf32>
    tpu.vector_store %arg7[%c0_37, %53, %c0_38, %c0_39], %56 {strides = array<i32>} : memref<1x8x8x128xf32, #tpu.memory_space<vmem>>, vector<1x1x8x128xf32>,
    %c3_i32 = arith.constant 3 : i32
    %57 = arith.index_cast %c3_i32 : i32 to index
    %c0_40 = arith.constant 0 : index
    %c0_41 = arith.constant 0 : index
    %58 = vector.load %arg8[%57, %c0_40, %c0_41] : memref<8x8x128xf32, #tpu.memory_space<vmem>>, vector<1x8x128xf32>
    %59 = vector.shape_cast %58 : vector<1x8x128xf32> to vector<8x128xf32>
    %cst_42 = arith.constant dense<0.000000e+00> : vector<8x128xf32>
    %60 = tpu.matmul %52, %13, %cst_42 {dimension_numbers = #tpu.dot_dimension_numbers<[1], [0], [0], [1], [0, 0, 1, 1], [], []>} : vector<8x128xf32>, vector<128x128xf32>, vector<8x128xf32> -> vector<8x128xf32>
    %61 = arith.addf %59, %60 : vector<8x128xf32>
    %cst_43 = arith.constant 0.899999976 : f32
    %62 = vector.broadcast %cst_43 : f32 to vector<8x128xf32>
    %63 = arith.mulf %62, %52 : vector<8x128xf32>
    %cst_44 = arith.constant 0.000000e+00 : f32
    %64 = vector.broadcast %cst_44 : f32 to vector<8x128xf32>
    %65 = arith.maximumf %61, %64 : vector<8x128xf32>
    %66 = arith.addf %63, %65 : vector<8x128xf32>
    %c0_45 = arith.constant 0 : index
    %67 = arith.index_cast %c3_i32 : i32 to index
    %c0_46 = arith.constant 0 : index
    %c0_47 = arith.constant 0 : index
    %68 = vector.load %arg7[%c0_45, %67, %c0_46, %c0_47] : memref<1x8x8x128xf32, #tpu.memory_space<vmem>>, vector<1x1x8x128xf32>
    %69 = vector.shape_cast %68 : vector<1x1x8x128xf32> to vector<8x128xf32>
    %70 = vector.shape_cast %66 : vector<8x128xf32> to vector<1x1x8x128xf32>
    tpu.vector_store %arg7[%c0_45, %67, %c0_46, %c0_47], %70 {strides = array<i32>} : memref<1x8x8x128xf32, #tpu.memory_space<vmem>>, vector<1x1x8x128xf32>,
    %c4_i32 = arith.constant 4 : i32
    %71 = arith.index_cast %c4_i32 : i32 to index
    %c0_48 = arith.constant 0 : index
    %c0_49 = arith.constant 0 : index
    %72 = vector.load %arg8[%71, %c0_48, %c0_49] : memref<8x8x128xf32, #tpu.memory_space<vmem>>, vector<1x8x128xf32>
    %73 = vector.shape_cast %72 : vector<1x8x128xf32> to vector<8x128xf32>
    %cst_50 = arith.constant dense<0.000000e+00> : vector<8x128xf32>
    %74 = tpu.matmul %66, %13, %cst_50 {dimension_numbers = #tpu.dot_dimension_numbers<[1], [0], [0], [1], [0, 0, 1, 1], [], []>} : vector<8x128xf32>, vector<128x128xf32>, vector<8x128xf32> -> vector<8x128xf32>
    %75 = arith.addf %73, %74 : vector<8x128xf32>
    %cst_51 = arith.constant 0.899999976 : f32
    %76 = vector.broadcast %cst_51 : f32 to vector<8x128xf32>
    %77 = arith.mulf %76, %66 : vector<8x128xf32>
    %cst_52 = arith.constant 0.000000e+00 : f32
    %78 = vector.broadcast %cst_52 : f32 to vector<8x128xf32>
    %79 = arith.maximumf %75, %78 : vector<8x128xf32>
    %80 = arith.addf %77, %79 : vector<8x128xf32>
    %c0_53 = arith.constant 0 : index
    %81 = arith.index_cast %c4_i32 : i32 to index
    %c0_54 = arith.constant 0 : index
    %c0_55 = arith.constant 0 : index
    %82 = vector.load %arg7[%c0_53, %81, %c0_54, %c0_55] : memref<1x8x8x128xf32, #tpu.memory_space<vmem>>, vector<1x1x8x128xf32>
    %83 = vector.shape_cast %82 : vector<1x1x8x128xf32> to vector<8x128xf32>
    %84 = vector.shape_cast %80 : vector<8x128xf32> to vector<1x1x8x128xf32>
    tpu.vector_store %arg7[%c0_53, %81, %c0_54, %c0_55], %84 {strides = array<i32>} : memref<1x8x8x128xf32, #tpu.memory_space<vmem>>, vector<1x1x8x128xf32>,
    %c5_i32 = arith.constant 5 : i32
    %85 = arith.index_cast %c5_i32 : i32 to index
    %c0_56 = arith.constant 0 : index
    %c0_57 = arith.constant 0 : index
    %86 = vector.load %arg8[%85, %c0_56, %c0_57] : memref<8x8x128xf32, #tpu.memory_space<vmem>>, vector<1x8x128xf32>
    %87 = vector.shape_cast %86 : vector<1x8x128xf32> to vector<8x128xf32>
    %cst_58 = arith.constant dense<0.000000e+00> : vector<8x128xf32>
    %88 = tpu.matmul %80, %13, %cst_58 {dimension_numbers = #tpu.dot_dimension_numbers<[1], [0], [0], [1], [0, 0, 1, 1], [], []>} : vector<8x128xf32>, vector<128x128xf32>, vector<8x128xf32> -> vector<8x128xf32>
    %89 = arith.addf %87, %88 : vector<8x128xf32>
    %cst_59 = arith.constant 0.899999976 : f32
    %90 = vector.broadcast %cst_59 : f32 to vector<8x128xf32>
    %91 = arith.mulf %90, %80 : vector<8x128xf32>
    %cst_60 = arith.constant 0.000000e+00 : f32
    %92 = vector.broadcast %cst_60 : f32 to vector<8x128xf32>
    %93 = arith.maximumf %89, %92 : vector<8x128xf32>
    %94 = arith.addf %91, %93 : vector<8x128xf32>
    %c0_61 = arith.constant 0 : index
    %95 = arith.index_cast %c5_i32 : i32 to index
    %c0_62 = arith.constant 0 : index
    %c0_63 = arith.constant 0 : index
    %96 = vector.load %arg7[%c0_61, %95, %c0_62, %c0_63] : memref<1x8x8x128xf32, #tpu.memory_space<vmem>>, vector<1x1x8x128xf32>
    %97 = vector.shape_cast %96 : vector<1x1x8x128xf32> to vector<8x128xf32>
    %98 = vector.shape_cast %94 : vector<8x128xf32> to vector<1x1x8x128xf32>
    tpu.vector_store %arg7[%c0_61, %95, %c0_62, %c0_63], %98 {strides = array<i32>} : memref<1x8x8x128xf32, #tpu.memory_space<vmem>>, vector<1x1x8x128xf32>,
    %c6_i32 = arith.constant 6 : i32
    %99 = arith.index_cast %c6_i32 : i32 to index
    %c0_64 = arith.constant 0 : index
    %c0_65 = arith.constant 0 : index
    %100 = vector.load %arg8[%99, %c0_64, %c0_65] : memref<8x8x128xf32, #tpu.memory_space<vmem>>, vector<1x8x128xf32>
    %101 = vector.shape_cast %100 : vector<1x8x128xf32> to vector<8x128xf32>
    %cst_66 = arith.constant dense<0.000000e+00> : vector<8x128xf32>
    %102 = tpu.matmul %94, %13, %cst_66 {dimension_numbers = #tpu.dot_dimension_numbers<[1], [0], [0], [1], [0, 0, 1, 1], [], []>} : vector<8x128xf32>, vector<128x128xf32>, vector<8x128xf32> -> vector<8x128xf32>
    %103 = arith.addf %101, %102 : vector<8x128xf32>
    %cst_67 = arith.constant 0.899999976 : f32
    %104 = vector.broadcast %cst_67 : f32 to vector<8x128xf32>
    %105 = arith.mulf %104, %94 : vector<8x128xf32>
    %cst_68 = arith.constant 0.000000e+00 : f32
    %106 = vector.broadcast %cst_68 : f32 to vector<8x128xf32>
    %107 = arith.maximumf %103, %106 : vector<8x128xf32>
    %108 = arith.addf %105, %107 : vector<8x128xf32>
    %c0_69 = arith.constant 0 : index
    %109 = arith.index_cast %c6_i32 : i32 to index
    %c0_70 = arith.constant 0 : index
    %c0_71 = arith.constant 0 : index
    %110 = vector.load %arg7[%c0_69, %109, %c0_70, %c0_71] : memref<1x8x8x128xf32, #tpu.memory_space<vmem>>, vector<1x1x8x128xf32>
    %111 = vector.shape_cast %110 : vector<1x1x8x128xf32> to vector<8x128xf32>
    %112 = vector.shape_cast %108 : vector<8x128xf32> to vector<1x1x8x128xf32>
    tpu.vector_store %arg7[%c0_69, %109, %c0_70, %c0_71], %112 {strides = array<i32>} : memref<1x8x8x128xf32, #tpu.memory_space<vmem>>, vector<1x1x8x128xf32>,
    %c7_i32 = arith.constant 7 : i32
    %113 = arith.index_cast %c7_i32 : i32 to index
    %c0_72 = arith.constant 0 : index
    %c0_73 = arith.constant 0 : index
    %114 = vector.load %arg8[%113, %c0_72, %c0_73] : memref<8x8x128xf32, #tpu.memory_space<vmem>>, vector<1x8x128xf32>
    %115 = vector.shape_cast %114 : vector<1x8x128xf32> to vector<8x128xf32>
    %cst_74 = arith.constant dense<0.000000e+00> : vector<8x128xf32>
    %116 = tpu.matmul %108, %13, %cst_74 {dimension_numbers = #tpu.dot_dimension_numbers<[1], [0], [0], [1], [0, 0, 1, 1], [], []>} : vector<8x128xf32>, vector<128x128xf32>, vector<8x128xf32> -> vector<8x128xf32>
    %117 = arith.addf %115, %116 : vector<8x128xf32>
    %cst_75 = arith.constant 0.899999976 : f32
    %118 = vector.broadcast %cst_75 : f32 to vector<8x128xf32>
    %119 = arith.mulf %118, %108 : vector<8x128xf32>
    %cst_76 = arith.constant 0.000000e+00 : f32
    %120 = vector.broadcast %cst_76 : f32 to vector<8x128xf32>
    %121 = arith.maximumf %117, %120 : vector<8x128xf32>
    %122 = arith.addf %119, %121 : vector<8x128xf32>
    %c0_77 = arith.constant 0 : index
    %123 = arith.index_cast %c7_i32 : i32 to index
    %c0_78 = arith.constant 0 : index
    %c0_79 = arith.constant 0 : index
    %124 = vector.load %arg7[%c0_77, %123, %c0_78, %c0_79] : memref<1x8x8x128xf32, #tpu.memory_space<vmem>>, vector<1x1x8x128xf32>
    %125 = vector.shape_cast %124 : vector<1x1x8x128xf32> to vector<8x128xf32>
    %126 = vector.shape_cast %122 : vector<8x128xf32> to vector<1x1x8x128xf32>
    tpu.vector_store %arg7[%c0_77, %123, %c0_78, %c0_79], %126 {strides = array<i32>} : memref<1x8x8x128xf32, #tpu.memory_space<vmem>>, vector<1x1x8x128xf32>,
    %c8_i32 = arith.constant 8 : i32
    %c0_80 = arith.constant 0 : index
    %c0_81 = arith.constant 0 : index
    %127 = vector.load %arg9[%c0_80, %c0_81] : memref<8x128xf32, #tpu.memory_space<vmem>>, vector<8x128xf32>
    tpu.vector_store %arg9[%c0_80, %c0_81], %122 {strides = array<i32>} : memref<8x128xf32, #tpu.memory_space<vmem>>, vector<8x128xf32>,
    return
  }
  func.func @transform_0(%arg0: i32, %arg1: i32) -> (i32, i32, i32, i32) {
    %c0_i32 = arith.constant 0 : i32
    %c0_i32_0 = arith.constant 0 : i32
    %c0_i32_1 = arith.constant 0 : i32
    return %arg1, %c0_i32, %arg0, %c0_i32_0 : i32, i32, i32, i32
  }
  func.func @transform_1(%arg0: i32, %arg1: i32) -> (i32, i32) {
    %c0_i32 = arith.constant 0 : i32
    %c0_i32_0 = arith.constant 0 : i32
    %c0_i32_1 = arith.constant 0 : i32
    return %c0_i32, %c0_i32_0 : i32, i32
  }
  func.func @transform_2(%arg0: i32, %arg1: i32) -> (i32, i32) {
    %c0_i32 = arith.constant 0 : i32
    %c0_i32_0 = arith.constant 0 : i32
    %c0_i32_1 = arith.constant 0 : i32
    return %c0_i32, %c0_i32_0 : i32, i32
  }
  func.func @transform_3(%arg0: i32, %arg1: i32) -> (i32, i32) {
    %c0_i32 = arith.constant 0 : i32
    %c0_i32_0 = arith.constant 0 : i32
    %c0_i32_1 = arith.constant 0 : i32
    return %c0_i32, %c0_i32_0 : i32, i32
  }
  func.func @transform_4(%arg0: i32, %arg1: i32) -> (i32, i32) {
    %c0_i32 = arith.constant 0 : i32
    %c0_i32_0 = arith.constant 0 : i32
    return %arg0, %c0_i32 : i32, i32
  }
  func.func @transform_5(%arg0: i32, %arg1: i32) -> (i32, i32, i32, i32) {
    %c0_i32 = arith.constant 0 : i32
    %c0_i32_0 = arith.constant 0 : i32
    %c0_i32_1 = arith.constant 0 : i32
    return %arg1, %c0_i32, %arg0, %c0_i32_0 : i32, i32, i32, i32
  }
}

</mosaic_0001>

<llo_original>
// kernel: tpu_custom_call.1
$region0: #{tpu_custom_call.1}
  #allocation0 [shape = 'u32[]', space=smem, size = 0x4, offset = 0x4, fixed_abs, tag = 'smem constant byte address 0x4 - core index']
  #allocation1 [shape = 'u32[144,128]{1,0:T(1,128)}', space=vmem, size = 0x12000, scoped, tag = 'internal scratch']
  #allocation2 [shape = 'f32[8,8,128]{2,1,0:T(8,128)}', space=vmem, size = 0x8000, scoped, tag = 'scratch operand']
  #allocation3 [shape = 'f32[8,128]{1,0:T(8,128)}', space=vmem, size = 0x1000, scoped, tag = 'scratch operand']
  %s0 = inlined_call_operand.vmem [shape: f32[2,8,8,4], index: 0, kind: input, shape index: {}]
  %s1 = inlined_call_operand.vmem [shape: f32[4,128], index: 1, kind: input, shape index: {}]
  %s2 = inlined_call_operand.vmem [shape: f32[128,128], index: 2, kind: input, shape index: {}]
  %s3 = inlined_call_operand.vmem [shape: f32[1,128], index: 3, kind: input, shape index: {}]
  %s4 = inlined_call_operand.vmem [shape: f32[8,128], index: 4, kind: input, shape index: {}]
  %s5 = inlined_call_operand.hbm [shape: f32[2,8,8,128], index: 5, kind: output, shape index: {}]
  %s6 = sld [smem:[#allocation0]]
  $region57: #{tpu_custom_call.1} parent=0
    _
  %s8 = ssub.s32 1, %s6
  %s9 = scalar_select 0, %s8, %s6
  $region1: #{tpu_custom_call.1} parent=0
    #allocation4 [shape = 'u8[65536]{0}', space=vmem, size = 0x10000, scoped, tag = 'output window, operand 0']
    #allocation5 [shape = 's32[2]{0}', space=sflag, size = 0x8, scoped, tag = 'scoped memory for tpu_custom_call.1']
    %10 = vsyncpa [#allocation5], 0
    %s11 = scalar_lea.sflag [#allocation5], 1
    %12 = vsyncpa %s11, 0
    loop: start=0, step=1, limit=4
    $region2: #{tpu_custom_call.1} parent=1 // loop_pre_header
      _
    $region3: #{tpu_custom_call.1} parent=1 // loop_header
      %s14 = sphi 0, %s18
      %p15 = scmp.ge.s32.totalorder %s14, 4
      %s21 = sphi 0, %s33
      %s22 = sphi 0, %s29
      %s23 = sphi 0, %s21
      %s24 = sphi 0, %s22
      %s25 = sphi 0, %s23
      %s26 = sphi 0, %s24
      %s38 = sphi 0, %s40
      %s41 = sphi 0, %s38
      %s42 = sphi 0, %s41
      %s58 = sphi 0, %s42
      %s62 = sphi 0, %s62
      %s64 = sphi 0, %s62
      %s65 = sphi 0, %s64
      %s79 = sphi 0, %s65
      %s83 = sphi 0, %s83
      %s85 = sphi 0, %s83
      %s86 = sphi 0, %s85
      %s100 = sphi 0, %s86
      %s104 = sphi 0, %s104
      %s106 = sphi 0, %s104
      %s107 = sphi 0, %s106
      %s121 = sphi 0, %s107
      %s127 = sphi 0, %s129
      %s130 = sphi 0, %s127
      %s131 = sphi 0, %s130
      %s147 = sphi 0, %s131
      %s155 = sphi 0, %s157
      %s158 = sphi 0, %s155
      %s159 = sphi 0, %s158
      %s175 = sphi 0, %s159
    $region4: #{tpu_custom_call.1} parent=1 // loop_header_branch
      %17 = sbr.rel (%p15) target = $region8
    $region5: #{tpu_custom_call.1} parent=1 // loop_body
      %s19 = ssub.s32 %s14, 1
      %s20 = ssub.s32 %s14, 2
      %s27 = sadd.s32 1, %s22
      %p28 = scmp.ge.s32.totalorder %s27, 2
      %s29 = scalar_select %p28, 0, %s27
      %s30 = sadd.s32 1, %s21
      %s31 = scalar_select %p28, %s30, %s21
      %p32 = scmp.ge.s32.totalorder %s31, 1
      %s33 = scalar_select %p32, 0, %s31
      %s34 = ssub.s32 %s22, %s29
      %s35 = ssub.s32 %s21, %s33
      %s36 = sor.u32 %s34, %s35
      %p37 = scmp.eq.s32.totalorder %s36, 0
      %s39 = sadd.s32 %s38, 1
      %s40 = scalar_select %p37, %s38, %s39
      %p43 = pneg %p37
      %p44 = scmp.eq.s32.totalorder %s14, 1
      %p45 = por %p43, %p44
      %p46 = scmp.ne.s32.totalorder %s38, %s41
      %p47 = scmp.eq.s32.totalorder %s14, 0
      %p48 = por %p46, %p47
      %p49 = scmp.ne.s32.totalorder %s38, %s41
      %p50 = scmp.eq.s32.totalorder %s19, 1
      %p51 = por %p49, %p50
      %p52 = scmp.ne.s32.totalorder %s41, %s42
      %p53 = scmp.eq.s32.totalorder %s19, 0
      %p54 = por %p52, %p53
      %p55 = scmp.ne.s32.totalorder %s41, %s42
      %p56 = scmp.eq.s32.totalorder %s20, 1
      %p57 = por %p55, %p56
      %p59 = scmp.ne.s32.totalorder %s42, %s58
      %p60 = scmp.eq.s32.totalorder %s20, 0
      %p61 = por %p59, %p60
      %s63 = sadd.s32 %s62, 1
      %p66 = scmp.eq.s32.totalorder %s14, 1
      %p67 = scmp.ne.s32.totalorder %s62, %s64
      %p68 = scmp.eq.s32.totalorder %s14, 0
      %p69 = por %p67, %p68
      %p70 = scmp.ne.s32.totalorder %s62, %s64
      %p71 = scmp.eq.s32.totalorder %s19, 1
      %p72 = por %p70, %p71
      %p73 = scmp.ne.s32.totalorder %s64, %s65
      %p74 = scmp.eq.s32.totalorder %s19, 0
      %p75 = por %p73, %p74
      %p76 = scmp.ne.s32.totalorder %s64, %s65
      %p77 = scmp.eq.s32.totalorder %s20, 1
      %p78 = por %p76, %p77
      %p80 = scmp.ne.s32.totalorder %s65, %s79
      %p81 = scmp.eq.s32.totalorder %s20, 0
      %p82 = por %p80, %p81
      %s84 = sadd.s32 %s83, 1
      %p87 = scmp.eq.s32.totalorder %s14, 1
      %p88 = scmp.ne.s32.totalorder %s83, %s85
      %p89 = scmp.eq.s32.totalorder %s14, 0
      %p90 = por %p88, %p89
      %p91 = scmp.ne.s32.totalorder %s83, %s85
      %p92 = scmp.eq.s32.totalorder %s19, 1
      %p93 = por %p91, %p92
      %p94 = scmp.ne.s32.totalorder %s85, %s86
      %p95 = scmp.eq.s32.totalorder %s19, 0
      %p96 = por %p94, %p95
      %p97 = scmp.ne.s32.totalorder %s85, %s86
      %p98 = scmp.eq.s32.totalorder %s20, 1
      %p99 = por %p97, %p98
      %p101 = scmp.ne.s32.totalorder %s86, %s100
      %p102 = scmp.eq.s32.totalorder %s20, 0
      %p103 = por %p101, %p102
      %s105 = sadd.s32 %s104, 1
      %p108 = scmp.eq.s32.totalorder %s14, 1
      %p109 = scmp.ne.s32.totalorder %s104, %s106
      %p110 = scmp.eq.s32.totalorder %s14, 0
      %p111 = por %p109, %p110
      %p112 = scmp.ne.s32.totalorder %s104, %s106
      %p113 = scmp.eq.s32.totalorder %s19, 1
      %p114 = por %p112, %p113
      %p115 = scmp.ne.s32.totalorder %s106, %s107
      %p116 = scmp.eq.s32.totalorder %s19, 0
      %p117 = por %p115, %p116
      %p118 = scmp.ne.s32.totalorder %s106, %s107
      %p119 = scmp.eq.s32.totalorder %s20, 1
      %p120 = por %p118, %p119
      %p122 = scmp.ne.s32.totalorder %s107, %s121
      %p123 = scmp.eq.s32.totalorder %s20, 0
      %p124 = por %p122, %p123
      %s125 = ssub.s32 %s21, %s33
      %p126 = scmp.eq.s32.totalorder %s125, 0
      %s128 = sadd.s32 %s127, 1
      %s129 = scalar_select %p126, %s127, %s128
      %p132 = pneg %p126
      %p133 = scmp.eq.s32.totalorder %s14, 1
      %p134 = por %p132, %p133
      %p135 = scmp.ne.s32.totalorder %s127, %s130
      %p136 = scmp.eq.s32.totalorder %s14, 0
      %p137 = por %p135, %p136
      %p138 = scmp.ne.s32.totalorder %s127, %s130
      %p139 = scmp.eq.s32.totalorder %s19, 1
      %p140 = por %p138, %p139
      %p141 = scmp.ne.s32.totalorder %s130, %s131
      %p142 = scmp.eq.s32.totalorder %s19, 0
      %p143 = por %p141, %p142
      %p144 = scmp.ne.s32.totalorder %s130, %s131
      %p145 = scmp.eq.s32.totalorder %s20, 1
      %p146 = por %p144, %p145
      %p148 = scmp.ne.s32.totalorder %s131, %s147
      %p149 = scmp.eq.s32.totalorder %s20, 0
      %p150 = por %p148, %p149
      %s151 = ssub.s32 %s22, %s29
      %s152 = ssub.s32 %s21, %s33
      %s153 = sor.u32 %s151, %s152
      %p154 = scmp.eq.s32.totalorder %s153, 0
      %s156 = sadd.s32 %s155, 1
      %s157 = scalar_select %p154, %s155, %s156
      %p160 = pneg %p154
      %p161 = scmp.eq.s32.totalorder %s14, 1
      %p162 = por %p160, %p161
      %p163 = scmp.ne.s32.totalorder %s155, %s158
      %p164 = scmp.eq.s32.totalorder %s14, 0
      %p165 = por %p163, %p164
      %p166 = scmp.ne.s32.totalorder %s155, %s158
      %p167 = scmp.eq.s32.totalorder %s19, 1
      %p168 = por %p166, %p167
      %p169 = scmp.ne.s32.totalorder %s158, %s159
      %p170 = scmp.eq.s32.totalorder %s19, 0
      %p171 = por %p169, %p170
      %p172 = scmp.ne.s32.totalorder %s158, %s159
      %p173 = scmp.eq.s32.totalorder %s20, 1
      %p174 = por %p172, %p173
      %p176 = scmp.ne.s32.totalorder %s159, %s175
      %p177 = scmp.eq.s32.totalorder %s20, 0
      %p178 = por %p176, %p177
      %p179 = scmp.le.s32.totalorder 1, %s14
      %p180 = scmp.lt.s32.totalorder %s14, 3
      %p181 = pnand %p179, %p180
      %p182 = pneg %p181
      // Predicated region
      $region9: #{tpu_custom_call.1} parent=5 // pred_check
        _
      $region10: #{tpu_custom_call.1} parent=5 // pred_check_branch
        %184 = sbr.rel (%p181) target = $region12
      $region11: #{tpu_custom_call.1} parent=5 // pred_region
        %s185 = ssub.s32 %s14, 1
        // Predicated region
        $region13: #{tpu_custom_call.1} parent=11 // pred_check
          %p186 = pneg %p75
        $region14: #{tpu_custom_call.1} parent=11 // pred_check_branch
          %188 = sbr.rel (%p186) target = $region16
        $region15: #{tpu_custom_call.1} parent=11 // pred_region
          _
        $region16: #{tpu_custom_call.1} parent=11 // pred_fallthru
          _
        // Predicated region
        $region17: #{tpu_custom_call.1} parent=11 // pred_check
          %p189 = pneg %p96
        $region18: #{tpu_custom_call.1} parent=11 // pred_check_branch
          %191 = sbr.rel (%p189) target = $region20
        $region19: #{tpu_custom_call.1} parent=11 // pred_region
          _
        $region20: #{tpu_custom_call.1} parent=11 // pred_fallthru
          _
        // Predicated region
        $region21: #{tpu_custom_call.1} parent=11 // pred_check
          %p192 = pneg %p117
        $region22: #{tpu_custom_call.1} parent=11 // pred_check_branch
          %194 = sbr.rel (%p192) target = $region24
        $region23: #{tpu_custom_call.1} parent=11 // pred_region
          _
        $region24: #{tpu_custom_call.1} parent=11 // pred_fallthru
          _
        // Predicated region
        $region25: #{tpu_custom_call.1} parent=11 // pred_check
          %p195 = pneg %p143
        $region26: #{tpu_custom_call.1} parent=11 // pred_check_branch
          %197 = sbr.rel (%p195) target = $region28
        $region27: #{tpu_custom_call.1} parent=11 // pred_region
          %p198 = scmp.lt.s32.totalorder %s23, 0
          %s199 = scalar_select %p198, %s23, 0
          %s200 = smul.addr %s199, 8
          %s201 = scalar_lea.vmem %s4, %s200
        $region28: #{tpu_custom_call.1} parent=11 // pred_fallthru
          _
      $region12: #{tpu_custom_call.1} parent=5 // pred_fallthru
        _
      %p202 = scmp.lt.s32.totalorder %s14, 2
      // Predicated region
      $region29: #{tpu_custom_call.1} parent=5 // pred_check
        %p203 = pneg %p202
      $region30: #{tpu_custom_call.1} parent=5 // pred_check_branch
        %205 = sbr.rel (%p203) target = $region32
      $region31: #{tpu_custom_call.1} parent=5 // pred_region
        // Predicated region
        $region33: #{tpu_custom_call.1} parent=31 // pred_check
          %p206 = pneg %p48
        $region34: #{tpu_custom_call.1} parent=31 // pred_check_branch
          %208 = sbr.rel (%p206) target = $region36
        $region35: #{tpu_custom_call.1} parent=31 // pred_region
          %p209 = scmp.lt.s32.totalorder %s22, 1
          %s210 = scalar_select %p209, %s22, 1
          %p211 = scmp.lt.s32.totalorder %s21, 0
          %s212 = scalar_select %p211, %s21, 0
          %s213 = smul.addr %s210, 8
          %s214 = sadd.s32 %s212, %s213
          %s215 = smul.addr %s214, 8
          %s216 = scalar_lea.vmem %s0, %s215
        $region36: #{tpu_custom_call.1} parent=31 // pred_fallthru
          _
      $region32: #{tpu_custom_call.1} parent=5 // pred_fallthru
        _
      %p217 = scmp.le.s32.totalorder 1, %s14
      %p218 = scmp.lt.s32.totalorder %s14, 3
      %p219 = pnand %p217, %p218
      %p220 = pneg %p219
      // Predicated region
      $region37: #{tpu_custom_call.1} parent=5 // pred_check
        _
      $region38: #{tpu_custom_call.1} parent=5 // pred_check_branch
        %222 = sbr.rel (%p219) target = $region40
      $region39: #{tpu_custom_call.1} parent=5 // pred_region
        %s223 = ssub.s32 %s14, 1
        %p224 = scmp.lt.s32.totalorder %s24, 1
        %s225 = scalar_select %p224, %s24, 1
        %p226 = scmp.lt.s32.totalorder %s23, 0
        %s227 = scalar_select %p226, %s23, 0
        %s228 = smul.addr %s225, 8
        %s229 = sadd.s32 %s227, %s228
        %s230 = smul.addr %s229, 8
        %s231 = scalar_lea.vmem %s0, %s230
        %p232 = pneg %p54
        %p233 = pneg %p51
        %p234 = pneg %p75
        %p235 = pneg %p72
        %p236 = pneg %p96
        %p237 = pneg %p93
        %p238 = pneg %p117
        %p239 = pneg %p114
        %p240 = scmp.lt.s32.totalorder %s23, 0
        %s241 = scalar_select %p240, %s23, 0
        %s242 = smul.addr %s241, 8
        %s243 = scalar_lea.vmem %s4, %s242
        %p244 = pneg %p143
        %p245 = pneg %p140
        %p246 = pneg %p171
        %p247 = pneg %p168
        %s248 = sand.u32 %s158, 1
        %s249 = scalar_lea.sflag [#allocation5], %s248
        %s250 = sand.u32 %s158, 1
        %s251 = smul.addr %s250, 64
        %s252 = scalar_lea.vmem [#allocation4], %s251
        %p253 = scmp.lt.s32.totalorder %s24, 1
        %s254 = scalar_select %p253, %s24, 1
        %p255 = scmp.lt.s32.totalorder %s23, 0
        %s256 = scalar_select %p255, %s23, 0
        %s257 = smul.addr %s254, 8
        %s258 = sadd.s32 %s256, %s257
        %s259 = smul.addr %s258, 8
        %s260 = scalar_lea.vmem %s0, %s259
        %p261 = scmp.lt.s32.totalorder %s23, 0
        %s262 = scalar_select %p261, %s23, 0
        %s263 = smul.addr %s262, 8
        %s264 = scalar_lea.vmem %s4, %s263
        %p265 = scmp.eq.s32.totalorder %s24, 0
        // Predicated region
        $region41: #{tpu_custom_call.1} parent=39 // pred_check
          %p266 = pneg %p265
        $region42: #{tpu_custom_call.1} parent=39 // pred_check_branch
          %268 = sbr.rel (%p266) target = $region44
        $region43: #{tpu_custom_call.1} parent=39 // pred_region
          %v269 = vld [vmem:[%s264] sm:$0xff]
          %270 = vst [vmem:[#allocation3] sm:$0xff] %v269
        $region44: #{tpu_custom_call.1} parent=39 // pred_fallthru
          _
        %v271 = vld [vmem:[%s260] sm:$0xff]
        %v272 = vld [vmem:[%s260 + $0x8] sm:$0xff]
        %v273 = vld [vmem:[%s260 + $0x10] sm:$0xff]
        %v274 = vld [vmem:[%s260 + $0x18] sm:$0xff]
        %v275 = vld [vmem:[%s260 + $0x20] sm:$0xff]
        %v276 = vld [vmem:[%s260 + $0x28] sm:$0xff]
        %v277 = vld [vmem:[%s260 + $0x30] sm:$0xff]
        %v278 = vld [vmem:[%s260 + $0x38] sm:$0xff]
        %v279 = vld [vmem:[%s1] sm:$0xf]
        %v280 = vld [vmem:[%s3] sm:$0x1]
        %v282 = vlaneseq
        %v283 = vshrl.u32 %v282, 7
        %v284 = vsub.s32 0, %v283
        %v285 = vrot.slane %v280, %v284
        %vm287 = vcmask 31744
        %v289 = vsel %vm287, %v271, 0
        %v292 = vsel %vm287, %v272, 0
        %v295 = vsel %vm287, %v273, 0
        %v298 = vsel %vm287, %v274, 0
        %v301 = vsel %vm287, %v275, 0
        %v304 = vsel %vm287, %v276, 0
        %v307 = vsel %vm287, %v277, 0
        %v310 = vsel %vm287, %v278, 0
        %vm312 = vcmask 1043456
        %v314 = vsel %vm312, %v279, 0
        %316 = vmatprep.subr.mxu0 0.0
        %317 = vmatpush1.msra.mxu0 %v314
        %318 = vmatprep.subr.mxu0 0.0
        %319 = vmatpush1.msra.mxu0 0.0
        %320 = vmatprep.subr.mxu0 0.0
        %321 = vmatpush1.msra.mxu0 0.0
        %322 = vmatprep.subr.mxu0 0.0
        %323 = vmatpush1.msra.mxu0 0.0
        %324 = vmatprep.subr.mxu0 0.0
        %325 = vmatpush1.msra.mxu0 0.0
        %326 = vmatprep.subr.mxu0 0.0
        %327 = vmatpush1.msra.mxu0 0.0
        %328 = vmatprep.subr.mxu0 0.0
        %329 = vmatpush1.msra.mxu0 0.0
        %330 = vmatprep.subr.mxu0 0.0
        %331 = vmatpush1.msra.mxu0 0.0
        %332 = vmatprep.subr.mxu0 0.0
        %333 = vmatpush1.msra.mxu0 0.0
        %334 = vmatprep.subr.mxu0 0.0
        %335 = vmatpush1.msra.mxu0 0.0
        %336 = vmatprep.subr.mxu0 0.0
        %337 = vmatpush1.msra.mxu0 0.0
        %338 = vmatprep.subr.mxu0 0.0
        %339 = vmatpush1.msra.mxu0 0.0
        %340 = vmatprep.subr.mxu0 0.0
        %341 = vmatpush1.msra.mxu0 0.0
        %342 = vmatprep.subr.mxu0 0.0
        %343 = vmatpush1.msra.mxu0 0.0
        %344 = vmatprep.subr.mxu0 0.0
        %345 = vmatpush1.msra.mxu0 0.0
        %346 = vmatprep.subr.mxu0 0.0
        %347 = vmatpush1.msra.mxu0 0.0
        %348 = vmatprep.subr.mxu0 0.0
        %349 = vmatpush1.msra.mxu0 0.0
        %350 = vmatprep.subr.mxu0 0.0
        %351 = vmatpush1.msra.mxu0 0.0
        %352 = vmatprep.subr.mxu0 0.0
        %353 = vmatpush1.msra.mxu0 0.0
        %354 = vmatprep.subr.mxu0 0.0
        %355 = vmatpush1.msra.mxu0 0.0
        %356 = vmatprep.subr.mxu0 0.0
        %357 = vmatpush1.msra.mxu0 0.0
        %358 = vmatprep.subr.mxu0 0.0
        %359 = vmatpush1.msra.mxu0 0.0
        %360 = vmatprep.subr.mxu0 0.0
        %361 = vmatpush1.msra.mxu0 0.0
        %362 = vmatprep.subr.mxu0 0.0
        %363 = vmatpush1.msra.mxu0 0.0
        %364 = vmatprep.subr.mxu0 0.0
        %365 = vmatpush1.msra.mxu0 0.0
        %366 = vmatprep.subr.mxu0 0.0
        %367 = vmatpush1.msra.mxu0 0.0
        %368 = vmatprep.subr.mxu0 0.0
        %369 = vmatpush1.msra.mxu0 0.0
        %370 = vmatprep.subr.mxu0 0.0
        %371 = vmatpush1.msra.mxu0 0.0
        %372 = vmatprep.subr.mxu0 0.0
        %373 = vmatpush1.msra.mxu0 0.0
        %374 = vmatprep.subr.mxu0 0.0
        %375 = vmatpush1.msra.mxu0 0.0
        %376 = vmatprep.subr.mxu0 0.0
        %377 = vmatpush1.msra.mxu0 0.0
        %378 = vmatprep.subr.mxu0 0.0
        %379 = vmatpush1.msra.mxu0 0.0
        %380 = vmatprep.mubr.f32.mxu0 0.0
        %381 = vmatmul.mubr.f32.gmra.mrb[0].mxu0 %v289
        %v382 = vpop.f32.mrb[0].mxu0
        %v383 = vadd.f32 %v285, %v382
        %v384 = vpop.f32.mrb[0].mxu0
        %385 = vmatprep.mubr.f32.mxu0 0.0
        %386 = vmatmul.mubr.f32.gmra.mrb[0].mxu0 %v292
        %v387 = vpop.f32.mrb[0].mxu0
        %v388 = vadd.f32 %v285, %v387
        %v389 = vpop.f32.mrb[0].mxu0
        %390 = vmatprep.mubr.f32.mxu0 0.0
        %391 = vmatmul.mubr.f32.gmra.mrb[0].mxu0 %v295
        %v392 = vpop.f32.mrb[0].mxu0
        %v393 = vadd.f32 %v285, %v392
        %v394 = vpop.f32.mrb[0].mxu0
        %395 = vmatprep.mubr.f32.mxu0 0.0
        %396 = vmatmul.mubr.f32.gmra.mrb[0].mxu0 %v298
        %v397 = vpop.f32.mrb[0].mxu0
        %v398 = vadd.f32 %v285, %v397
        %v399 = vpop.f32.mrb[0].mxu0
        %400 = vmatprep.mubr.f32.mxu0 0.0
        %401 = vmatmul.mubr.f32.gmra.mrb[0].mxu0 %v301
        %v402 = vpop.f32.mrb[0].mxu0
        %v403 = vadd.f32 %v285, %v402
        %v404 = vpop.f32.mrb[0].mxu0
        %405 = vmatprep.mubr.f32.mxu0 0.0
        %406 = vmatmul.mubr.f32.gmra.mrb[0].mxu0 %v304
        %v407 = vpop.f32.mrb[0].mxu0
        %v408 = vadd.f32 %v285, %v407
        %v409 = vpop.f32.mrb[0].mxu0
        %410 = vmatprep.mubr.f32.mxu0 0.0
        %411 = vmatmul.mubr.f32.gmra.mrb[0].mxu0 %v307
        %v412 = vpop.f32.mrb[0].mxu0
        %v413 = vadd.f32 %v285, %v412
        %v414 = vpop.f32.mrb[0].mxu0
        %415 = vmatprep.mubr.f32.mxu0 0.0
        %416 = vmatmul.mubr.f32.gmra.mrb[0].mxu0 %v310
        %v417 = vpop.f32.mrb[0].mxu0
        %v418 = vadd.f32 %v285, %v417
        %v419 = vpop.f32.mrb[0].mxu0
        %420 = vdwg.mxu0
        %421 = vst [vmem:[#allocation2] sm:$0xff] %v383
        %422 = vst [vmem:[#allocation2 + $0x8] sm:$0xff] %v388
        %423 = vst [vmem:[#allocation2 + $0x10] sm:$0xff] %v393
        %424 = vst [vmem:[#allocation2 + $0x18] sm:$0xff] %v398
        %425 = vst [vmem:[#allocation2 + $0x20] sm:$0xff] %v403
        %426 = vst [vmem:[#allocation2 + $0x28] sm:$0xff] %v408
        %427 = vst [vmem:[#allocation2 + $0x30] sm:$0xff] %v413
        %428 = vst [vmem:[#allocation2 + $0x38] sm:$0xff] %v418
        %v429 = vld [vmem:[%s2] sm:$0xff]
        %v430 = vld [vmem:[%s2 + $0x8] sm:$0xff]
        %v431 = vld [vmem:[%s2 + $0x10] sm:$0xff]
        %v432 = vld [vmem:[%s2 + $0x18] sm:$0xff]
        %v433 = vld [vmem:[%s2 + $0x20] sm:$0xff]
        %v434 = vld [vmem:[%s2 + $0x28] sm:$0xff]
        %v435 = vld [vmem:[%s2 + $0x30] sm:$0xff]
        %v436 = vld [vmem:[%s2 + $0x38] sm:$0xff]
        %v437 = vld [vmem:[%s2 + $0x40] sm:$0xff]
        %v438 = vld [vmem:[%s2 + $0x48] sm:$0xff]
        %v439 = vld [vmem:[%s2 + $0x50] sm:$0xff]
        %v440 = vld [vmem:[%s2 + $0x58] sm:$0xff]
        %v441 = vld [vmem:[%s2 + $0x60] sm:$0xff]
        %v442 = vld [vmem:[%s2 + $0x68] sm:$0xff]
        %v443 = vld [vmem:[%s2 + $0x70] sm:$0xff]
        %v444 = vld [vmem:[%s2 + $0x78] sm:$0xff]
        %v445 = vld [vmem:[#allocation3] sm:$0xff]
        %v446 = vld [vmem:[#allocation2] sm:$0xff]
        %447 = vmatprep.subr.mxu0 0.0
        %448 = vmatpush1.msra.mxu0 %v429
        %449 = vmatprep.subr.mxu0 0.0
        %450 = vmatpush1.msra.mxu0 %v430
        %451 = vmatprep.subr.mxu0 0.0
        %452 = vmatpush1.msra.mxu0 %v431
        %453 = vmatprep.subr.mxu0 0.0
        %454 = vmatpush1.msra.mxu0 %v432
        %455 = vmatprep.subr.mxu0 0.0
        %456 = vmatpush1.msra.mxu0 %v433
        %457 = vmatprep.subr.mxu0 0.0
        %458 = vmatpush1.msra.mxu0 %v434
        %459 = vmatprep.subr.mxu0 0.0
        %460 = vmatpush1.msra.mxu0 %v435
        %461 = vmatprep.subr.mxu0 0.0
        %462 = vmatpush1.msra.mxu0 %v436
        %463 = vmatprep.subr.mxu0 0.0
        %464 = vmatpush1.msra.mxu0 %v437
        %465 = vmatprep.subr.mxu0 0.0
        %466 = vmatpush1.msra.mxu0 %v438
        %467 = vmatprep.subr.mxu0 0.0
        %468 = vmatpush1.msra.mxu0 %v439
        %469 = vmatprep.subr.mxu0 0.0
        %470 = vmatpush1.msra.mxu0 %v440
        %471 = vmatprep.subr.mxu0 0.0
        %472 = vmatpush1.msra.mxu0 %v441
        %473 = vmatprep.subr.mxu0 0.0
        %474 = vmatpush1.msra.mxu0 %v442
        %475 = vmatprep.subr.mxu0 0.0
        %476 = vmatpush1.msra.mxu0 %v443
        %477 = vmatprep.subr.mxu0 0.0
        %478 = vmatpush1.msra.mxu0 %v444
        %479 = vmatprep.subr.mxu0 0.0
        %480 = vmatpush1.msra.mxu0 0.0
        %481 = vmatprep.subr.mxu0 0.0
        %482 = vmatpush1.msra.mxu0 0.0
        %483 = vmatprep.subr.mxu0 0.0
        %484 = vmatpush1.msra.mxu0 0.0
        %485 = vmatprep.subr.mxu0 0.0
        %486 = vmatpush1.msra.mxu0 0.0
        %487 = vmatprep.subr.mxu0 0.0
        %488 = vmatpush1.msra.mxu0 0.0
        %489 = vmatprep.subr.mxu0 0.0
        %490 = vmatpush1.msra.mxu0 0.0
        %491 = vmatprep.subr.mxu0 0.0
        %492 = vmatpush1.msra.mxu0 0.0
        %493 = vmatprep.subr.mxu0 0.0
        %494 = vmatpush1.msra.mxu0 0.0
        %495 = vmatprep.subr.mxu0 0.0
        %496 = vmatpush1.msra.mxu0 0.0
        %497 = vmatprep.subr.mxu0 0.0
        %498 = vmatpush1.msra.mxu0 0.0
        %499 = vmatprep.subr.mxu0 0.0
        %500 = vmatpush1.msra.mxu0 0.0
        %501 = vmatprep.subr.mxu0 0.0
        %502 = vmatpush1.msra.mxu0 0.0
        %503 = vmatprep.subr.mxu0 0.0
        %504 = vmatpush1.msra.mxu0 0.0
        %505 = vmatprep.subr.mxu0 0.0
        %506 = vmatpush1.msra.mxu0 0.0
        %507 = vmatprep.subr.mxu0 0.0
        %508 = vmatpush1.msra.mxu0 0.0
        %509 = vmatprep.subr.mxu0 0.0
        %510 = vmatpush1.msra.mxu0 0.0
        %511 = vmatprep.mubr.f32.mxu0 0.0
        %512 = vmatmul.mubr.f32.gmra.mrb[0].mxu0 %v445
        %v513 = vpop.f32.mrb[0].mxu0
        %v514 = vadd.f32 0.0, %v513
        %v515 = vpop.f32.mrb[0].mxu0
        %516 = vdwg.mxu0
        %v517 = vadd.f32 %v446, %v514
        %v518 = vmul.f32 %v445, 0.9
        %v519 = vmax.f32 %v517, 0.0
        %v520 = vadd.f32 %v518, %v519
        %521 = vst [vmem:[%s252] sm:$0xff] %v520
        %s522 = scalar_lea.vmem [#allocation2], 8
        %v523 = vld [vmem:[%s522] sm:$0xff]
        %524 = vmatprep.subr.mxu0 0.0
        %525 = vmatpush1.msra.mxu0 %v429
        %526 = vmatprep.subr.mxu0 0.0
        %527 = vmatpush1.msra.mxu0 %v430
        %528 = vmatprep.subr.mxu0 0.0
        %529 = vmatpush1.msra.mxu0 %v431
        %530 = vmatprep.subr.mxu0 0.0
        %531 = vmatpush1.msra.mxu0 %v432
        %532 = vmatprep.subr.mxu0 0.0
        %533 = vmatpush1.msra.mxu0 %v433
        %534 = vmatprep.subr.mxu0 0.0
        %535 = vmatpush1.msra.mxu0 %v434
        %536 = vmatprep.subr.mxu0 0.0
        %537 = vmatpush1.msra.mxu0 %v435
        %538 = vmatprep.subr.mxu0 0.0
        %539 = vmatpush1.msra.mxu0 %v436
        %540 = vmatprep.subr.mxu0 0.0
        %541 = vmatpush1.msra.mxu0 %v437
        %542 = vmatprep.subr.mxu0 0.0
        %543 = vmatpush1.msra.mxu0 %v438
        %544 = vmatprep.subr.mxu0 0.0
        %545 = vmatpush1.msra.mxu0 %v439
        %546 = vmatprep.subr.mxu0 0.0
        %547 = vmatpush1.msra.mxu0 %v440
        %548 = vmatprep.subr.mxu0 0.0
        %549 = vmatpush1.msra.mxu0 %v441
        %550 = vmatprep.subr.mxu0 0.0
        %551 = vmatpush1.msra.mxu0 %v442
        %552 = vmatprep.subr.mxu0 0.0
        %553 = vmatpush1.msra.mxu0 %v443
        %554 = vmatprep.subr.mxu0 0.0
        %555 = vmatpush1.msra.mxu0 %v444
        %556 = vmatprep.subr.mxu0 0.0
        %557 = vmatpush1.msra.mxu0 0.0
        %558 = vmatprep.subr.mxu0 0.0
        %559 = vmatpush1.msra.mxu0 0.0
        %560 = vmatprep.subr.mxu0 0.0
        %561 = vmatpush1.msra.mxu0 0.0
        %562 = vmatprep.subr.mxu0 0.0
        %563 = vmatpush1.msra.mxu0 0.0
        %564 = vmatprep.subr.mxu0 0.0
        %565 = vmatpush1.msra.mxu0 0.0
        %566 = vmatprep.subr.mxu0 0.0
        %567 = vmatpush1.msra.mxu0 0.0
        %568 = vmatprep.subr.mxu0 0.0
        %569 = vmatpush1.msra.mxu0 0.0
        %570 = vmatprep.subr.mxu0 0.0
        %571 = vmatpush1.msra.mxu0 0.0
        %572 = vmatprep.subr.mxu0 0.0
        %573 = vmatpush1.msra.mxu0 0.0
        %574 = vmatprep.subr.mxu0 0.0
        %575 = vmatpush1.msra.mxu0 0.0
        %576 = vmatprep.subr.mxu0 0.0
        %577 = vmatpush1.msra.mxu0 0.0
        %578 = vmatprep.subr.mxu0 0.0
        %579 = vmatpush1.msra.mxu0 0.0
        %580 = vmatprep.subr.mxu0 0.0
        %581 = vmatpush1.msra.mxu0 0.0
        %582 = vmatprep.subr.mxu0 0.0
        %583 = vmatpush1.msra.mxu0 0.0
        %584 = vmatprep.subr.mxu0 0.0
        %585 = vmatpush1.msra.mxu0 0.0
        %586 = vmatprep.subr.mxu0 0.0
        %587 = vmatpush1.msra.mxu0 0.0
        %588 = vmatprep.mubr.f32.mxu0 0.0
        %589 = vmatmul.mubr.f32.gmra.mrb[0].mxu0 %v520
        %v590 = vpop.f32.mrb[0].mxu0
        %v591 = vadd.f32 0.0, %v590
        %v592 = vpop.f32.mrb[0].mxu0
        %593 = vdwg.mxu0
        %v594 = vadd.f32 %v523, %v591
        %v595 = vmul.f32 %v520, 0.9
        %v596 = vmax.f32 %v594, 0.0
        %v597 = vadd.f32 %v595, %v596
        %s598 = scalar_lea.vmem %s252, 8 [#allocation4]
        %599 = vst [vmem:[%s598] sm:$0xff] %v597
        %s600 = scalar_lea.vmem [#allocation2], 16
        %v601 = vld [vmem:[%s600] sm:$0xff]
        %602 = vmatprep.subr.mxu0 0.0
        %603 = vmatpush1.msra.mxu0 %v429
        %604 = vmatprep.subr.mxu0 0.0
        %605 = vmatpush1.msra.mxu0 %v430
        %606 = vmatprep.subr.mxu0 0.0
        %607 = vmatpush1.msra.mxu0 %v431
        %608 = vmatprep.subr.mxu0 0.0
        %609 = vmatpush1.msra.mxu0 %v432
        %610 = vmatprep.subr.mxu0 0.0
        %611 = vmatpush1.msra.mxu0 %v433
        %612 = vmatprep.subr.mxu0 0.0
        %613 = vmatpush1.msra.mxu0 %v434
        %614 = vmatprep.subr.mxu0 0.0
        %615 = vmatpush1.msra.mxu0 %v435
        %616 = vmatprep.subr.mxu0 0.0
        %617 = vmatpush1.msra.mxu0 %v436
        %618 = vmatprep.subr.mxu0 0.0
        %619 = vmatpush1.msra.mxu0 %v437
        %620 = vmatprep.subr.mxu0 0.0
        %621 = vmatpush1.msra.mxu0 %v438
        %622 = vmatprep.subr.mxu0 0.0
        %623 = vmatpush1.msra.mxu0 %v439
        %624 = vmatprep.subr.mxu0 0.0
        %625 = vmatpush1.msra.mxu0 %v440
        %626 = vmatprep.subr.mxu0 0.0
        %627 = vmatpush1.msra.mxu0 %v441
        %628 = vmatprep.subr.mxu0 0.0
        %629 = vmatpush1.msra.mxu0 %v442
        %630 = vmatprep.subr.mxu0 0.0
        %631 = vmatpush1.msra.mxu0 %v443
        %632 = vmatprep.subr.mxu0 0.0
        %633 = vmatpush1.msra.mxu0 %v444
        %634 = vmatprep.subr.mxu0 0.0
        %635 = vmatpush1.msra.mxu0 0.0
        %636 = vmatprep.subr.mxu0 0.0
        %637 = vmatpush1.msra.mxu0 0.0
        %638 = vmatprep.subr.mxu0 0.0
        %639 = vmatpush1.msra.mxu0 0.0
        %640 = vmatprep.subr.mxu0 0.0
        %641 = vmatpush1.msra.mxu0 0.0
        %642 = vmatprep.subr.mxu0 0.0
        %643 = vmatpush1.msra.mxu0 0.0
        %644 = vmatprep.subr.mxu0 0.0
        %645 = vmatpush1.msra.mxu0 0.0
        %646 = vmatprep.subr.mxu0 0.0
        %647 = vmatpush1.msra.mxu0 0.0
        %648 = vmatprep.subr.mxu0 0.0
        %649 = vmatpush1.msra.mxu0 0.0
        %650 = vmatprep.subr.mxu0 0.0
        %651 = vmatpush1.msra.mxu0 0.0
        %652 = vmatprep.subr.mxu0 0.0
        %653 = vmatpush1.msra.mxu0 0.0
        %654 = vmatprep.subr.mxu0 0.0
        %655 = vmatpush1.msra.mxu0 0.0
        %656 = vmatprep.subr.mxu0 0.0
        %657 = vmatpush1.msra.mxu0 0.0
        %658 = vmatprep.subr.mxu0 0.0
        %659 = vmatpush1.msra.mxu0 0.0
        %660 = vmatprep.subr.mxu0 0.0
        %661 = vmatpush1.msra.mxu0 0.0
        %662 = vmatprep.subr.mxu0 0.0
        %663 = vmatpush1.msra.mxu0 0.0
        %664 = vmatprep.subr.mxu0 0.0
        %665 = vmatpush1.msra.mxu0 0.0
        %666 = vmatprep.mubr.f32.mxu0 0.0
        %667 = vmatmul.mubr.f32.gmra.mrb[0].mxu0 %v597
        %v668 = vpop.f32.mrb[0].mxu0
        %v669 = vadd.f32 0.0, %v668
        %v670 = vpop.f32.mrb[0].mxu0
        %671 = vdwg.mxu0
        %v672 = vadd.f32 %v601, %v669
        %v673 = vmul.f32 %v597, 0.9
        %v674 = vmax.f32 %v672, 0.0
        %v675 = vadd.f32 %v673, %v674
        %s676 = scalar_lea.vmem %s252, 16 [#allocation4]
        %677 = vst [vmem:[%s676] sm:$0xff] %v675
        %s678 = scalar_lea.vmem [#allocation2], 24
        %v679 = vld [vmem:[%s678] sm:$0xff]
        %680 = vmatprep.subr.mxu0 0.0
        %681 = vmatpush1.msra.mxu0 %v429
        %682 = vmatprep.subr.mxu0 0.0
        %683 = vmatpush1.msra.mxu0 %v430
        %684 = vmatprep.subr.mxu0 0.0
        %685 = vmatpush1.msra.mxu0 %v431
        %686 = vmatprep.subr.mxu0 0.0
        %687 = vmatpush1.msra.mxu0 %v432
        %688 = vmatprep.subr.mxu0 0.0
        %689 = vmatpush1.msra.mxu0 %v433
        %690 = vmatprep.subr.mxu0 0.0
        %691 = vmatpush1.msra.mxu0 %v434
        %692 = vmatprep.subr.mxu0 0.0
        %693 = vmatpush1.msra.mxu0 %v435
        %694 = vmatprep.subr.mxu0 0.0
        %695 = vmatpush1.msra.mxu0 %v436
        %696 = vmatprep.subr.mxu0 0.0
        %697 = vmatpush1.msra.mxu0 %v437
        %698 = vmatprep.subr.mxu0 0.0
        %699 = vmatpush1.msra.mxu0 %v438
        %700 = vmatprep.subr.mxu0 0.0
        %701 = vmatpush1.msra.mxu0 %v439
        %702 = vmatprep.subr.mxu0 0.0
        %703 = vmatpush1.msra.mxu0 %v440
        %704 = vmatprep.subr.mxu0 0.0
        %705 = vmatpush1.msra.mxu0 %v441
        %706 = vmatprep.subr.mxu0 0.0
        %707 = vmatpush1.msra.mxu0 %v442
        %708 = vmatprep.subr.mxu0 0.0
        %709 = vmatpush1.msra.mxu0 %v443
        %710 = vmatprep.subr.mxu0 0.0
        %711 = vmatpush1.msra.mxu0 %v444
        %712 = vmatprep.subr.mxu0 0.0
        %713 = vmatpush1.msra.mxu0 0.0
        %714 = vmatprep.subr.mxu0 0.0
        %715 = vmatpush1.msra.mxu0 0.0
        %716 = vmatprep.subr.mxu0 0.0
        %717 = vmatpush1.msra.mxu0 0.0
        %718 = vmatprep.subr.mxu0 0.0
        %719 = vmatpush1.msra.mxu0 0.0
        %720 = vmatprep.subr.mxu0 0.0
        %721 = vmatpush1.msra.mxu0 0.0
        %722 = vmatprep.subr.mxu0 0.0
        %723 = vmatpush1.msra.mxu0 0.0
        %724 = vmatprep.subr.mxu0 0.0
        %725 = vmatpush1.msra.mxu0 0.0
        %726 = vmatprep.subr.mxu0 0.0
        %727 = vmatpush1.msra.mxu0 0.0
        %728 = vmatprep.subr.mxu0 0.0
        %729 = vmatpush1.msra.mxu0 0.0
        %730 = vmatprep.subr.mxu0 0.0
        %731 = vmatpush1.msra.mxu0 0.0
        %732 = vmatprep.subr.mxu0 0.0
        %733 = vmatpush1.msra.mxu0 0.0
        %734 = vmatprep.subr.mxu0 0.0
        %735 = vmatpush1.msra.mxu0 0.0
        %736 = vmatprep.subr.mxu0 0.0
        %737 = vmatpush1.msra.mxu0 0.0
        %738 = vmatprep.subr.mxu0 0.0
        %739 = vmatpush1.msra.mxu0 0.0
        %740 = vmatprep.subr.mxu0 0.0
        %741 = vmatpush1.msra.mxu0 0.0
        %742 = vmatprep.subr.mxu0 0.0
        %743 = vmatpush1.msra.mxu0 0.0
        %744 = vmatprep.mubr.f32.mxu0 0.0
        %745 = vmatmul.mubr.f32.gmra.mrb[0].mxu0 %v675
        %v746 = vpop.f32.mrb[0].mxu0
        %v747 = vadd.f32 0.0, %v746
        %v748 = vpop.f32.mrb[0].mxu0
        %749 = vdwg.mxu0
        %v750 = vadd.f32 %v679, %v747
        %v751 = vmul.f32 %v675, 0.9
        %v752 = vmax.f32 %v750, 0.0
        %v753 = vadd.f32 %v751, %v752
        %s754 = scalar_lea.vmem %s252, 24 [#allocation4]
        %755 = vst [vmem:[%s754] sm:$0xff] %v753
        %s756 = scalar_lea.vmem [#allocation2], 32
        %v757 = vld [vmem:[%s756] sm:$0xff]
        %758 = vmatprep.subr.mxu0 0.0
        %759 = vmatpush1.msra.mxu0 %v429
        %760 = vmatprep.subr.mxu0 0.0
        %761 = vmatpush1.msra.mxu0 %v430
        %762 = vmatprep.subr.mxu0 0.0
        %763 = vmatpush1.msra.mxu0 %v431
        %764 = vmatprep.subr.mxu0 0.0
        %765 = vmatpush1.msra.mxu0 %v432
        %766 = vmatprep.subr.mxu0 0.0
        %767 = vmatpush1.msra.mxu0 %v433
        %768 = vmatprep.subr.mxu0 0.0
        %769 = vmatpush1.msra.mxu0 %v434
        %770 = vmatprep.subr.mxu0 0.0
        %771 = vmatpush1.msra.mxu0 %v435
        %772 = vmatprep.subr.mxu0 0.0
        %773 = vmatpush1.msra.mxu0 %v436
        %774 = vmatprep.subr.mxu0 0.0
        %775 = vmatpush1.msra.mxu0 %v437
        %776 = vmatprep.subr.mxu0 0.0
        %777 = vmatpush1.msra.mxu0 %v438
        %778 = vmatprep.subr.mxu0 0.0
        %779 = vmatpush1.msra.mxu0 %v439
        %780 = vmatprep.subr.mxu0 0.0
        %781 = vmatpush1.msra.mxu0 %v440
        %782 = vmatprep.subr.mxu0 0.0
        %783 = vmatpush1.msra.mxu0 %v441
        %784 = vmatprep.subr.mxu0 0.0
        %785 = vmatpush1.msra.mxu0 %v442
        %786 = vmatprep.subr.mxu0 0.0
        %787 = vmatpush1.msra.mxu0 %v443
        %788 = vmatprep.subr.mxu0 0.0
        %789 = vmatpush1.msra.mxu0 %v444
        %790 = vmatprep.subr.mxu0 0.0
        %791 = vmatpush1.msra.mxu0 0.0
        %792 = vmatprep.subr.mxu0 0.0
        %793 = vmatpush1.msra.mxu0 0.0
        %794 = vmatprep.subr.mxu0 0.0
        %795 = vmatpush1.msra.mxu0 0.0
        %796 = vmatprep.subr.mxu0 0.0
        %797 = vmatpush1.msra.mxu0 0.0
        %798 = vmatprep.subr.mxu0 0.0
        %799 = vmatpush1.msra.mxu0 0.0
        %800 = vmatprep.subr.mxu0 0.0
        %801 = vmatpush1.msra.mxu0 0.0
        %802 = vmatprep.subr.mxu0 0.0
        %803 = vmatpush1.msra.mxu0 0.0
        %804 = vmatprep.subr.mxu0 0.0
        %805 = vmatpush1.msra.mxu0 0.0
        %806 = vmatprep.subr.mxu0 0.0
        %807 = vmatpush1.msra.mxu0 0.0
        %808 = vmatprep.subr.mxu0 0.0
        %809 = vmatpush1.msra.mxu0 0.0
        %810 = vmatprep.subr.mxu0 0.0
        %811 = vmatpush1.msra.mxu0 0.0
        %812 = vmatprep.subr.mxu0 0.0
        %813 = vmatpush1.msra.mxu0 0.0
        %814 = vmatprep.subr.mxu0 0.0
        %815 = vmatpush1.msra.mxu0 0.0
        %816 = vmatprep.subr.mxu0 0.0
        %817 = vmatpush1.msra.mxu0 0.0
        %818 = vmatprep.subr.mxu0 0.0
        %819 = vmatpush1.msra.mxu0 0.0
        %820 = vmatprep.subr.mxu0 0.0
        %821 = vmatpush1.msra.mxu0 0.0
        %822 = vmatprep.mubr.f32.mxu0 0.0
        %823 = vmatmul.mubr.f32.gmra.mrb[0].mxu0 %v753
        %v824 = vpop.f32.mrb[0].mxu0
        %v825 = vadd.f32 0.0, %v824
        %v826 = vpop.f32.mrb[0].mxu0
        %827 = vdwg.mxu0
        %v828 = vadd.f32 %v757, %v825
        %v829 = vmul.f32 %v753, 0.9
        %v830 = vmax.f32 %v828, 0.0
        %v831 = vadd.f32 %v829, %v830
        %s832 = scalar_lea.vmem %s252, 32 [#allocation4]
        %833 = vst [vmem:[%s832] sm:$0xff] %v831
        %s834 = scalar_lea.vmem [#allocation2], 40
        %v835 = vld [vmem:[%s834] sm:$0xff]
        %836 = vmatprep.subr.mxu0 0.0
        %837 = vmatpush1.msra.mxu0 %v429
        %838 = vmatprep.subr.mxu0 0.0
        %839 = vmatpush1.msra.mxu0 %v430
        %840 = vmatprep.subr.mxu0 0.0
        %841 = vmatpush1.msra.mxu0 %v431
        %842 = vmatprep.subr.mxu0 0.0
        %843 = vmatpush1.msra.mxu0 %v432
        %844 = vmatprep.subr.mxu0 0.0
        %845 = vmatpush1.msra.mxu0 %v433
        %846 = vmatprep.subr.mxu0 0.0
        %847 = vmatpush1.msra.mxu0 %v434
        %848 = vmatprep.subr.mxu0 0.0
        %849 = vmatpush1.msra.mxu0 %v435
        %850 = vmatprep.subr.mxu0 0.0
        %851 = vmatpush1.msra.mxu0 %v436
        %852 = vmatprep.subr.mxu0 0.0
        %853 = vmatpush1.msra.mxu0 %v437
        %854 = vmatprep.subr.mxu0 0.0
        %855 = vmatpush1.msra.mxu0 %v438
        %856 = vmatprep.subr.mxu0 0.0
        %857 = vmatpush1.msra.mxu0 %v439
        %858 = vmatprep.subr.mxu0 0.0
        %859 = vmatpush1.msra.mxu0 %v440
        %860 = vmatprep.subr.mxu0 0.0
        %861 = vmatpush1.msra.mxu0 %v441
        %862 = vmatprep.subr.mxu0 0.0
        %863 = vmatpush1.msra.mxu0 %v442
        %864 = vmatprep.subr.mxu0 0.0
        %865 = vmatpush1.msra.mxu0 %v443
        %866 = vmatprep.subr.mxu0 0.0
        %867 = vmatpush1.msra.mxu0 %v444
        %868 = vmatprep.subr.mxu0 0.0
        %869 = vmatpush1.msra.mxu0 0.0
        %870 = vmatprep.subr.mxu0 0.0
        %871 = vmatpush1.msra.mxu0 0.0
        %872 = vmatprep.subr.mxu0 0.0
        %873 = vmatpush1.msra.mxu0 0.0
        %874 = vmatprep.subr.mxu0 0.0
        %875 = vmatpush1.msra.mxu0 0.0
        %876 = vmatprep.subr.mxu0 0.0
        %877 = vmatpush1.msra.mxu0 0.0
        %878 = vmatprep.subr.mxu0 0.0
        %879 = vmatpush1.msra.mxu0 0.0
        %880 = vmatprep.subr.mxu0 0.0
        %881 = vmatpush1.msra.mxu0 0.0
        %882 = vmatprep.subr.mxu0 0.0
        %883 = vmatpush1.msra.mxu0 0.0
        %884 = vmatprep.subr.mxu0 0.0
        %885 = vmatpush1.msra.mxu0 0.0
        %886 = vmatprep.subr.mxu0 0.0
        %887 = vmatpush1.msra.mxu0 0.0
        %888 = vmatprep.subr.mxu0 0.0
        %889 = vmatpush1.msra.mxu0 0.0
        %890 = vmatprep.subr.mxu0 0.0
        %891 = vmatpush1.msra.mxu0 0.0
        %892 = vmatprep.subr.mxu0 0.0
        %893 = vmatpush1.msra.mxu0 0.0
        %894 = vmatprep.subr.mxu0 0.0
        %895 = vmatpush1.msra.mxu0 0.0
        %896 = vmatprep.subr.mxu0 0.0
        %897 = vmatpush1.msra.mxu0 0.0
        %898 = vmatprep.subr.mxu0 0.0
        %899 = vmatpush1.msra.mxu0 0.0
        %900 = vmatprep.mubr.f32.mxu0 0.0
        %901 = vmatmul.mubr.f32.gmra.mrb[0].mxu0 %v831
        %v902 = vpop.f32.mrb[0].mxu0
        %v903 = vadd.f32 0.0, %v902
        %v904 = vpop.f32.mrb[0].mxu0
        %905 = vdwg.mxu0
        %v906 = vadd.f32 %v835, %v903
        %v907 = vmul.f32 %v831, 0.9
        %v908 = vmax.f32 %v906, 0.0
        %v909 = vadd.f32 %v907, %v908
        %s910 = scalar_lea.vmem %s252, 40 [#allocation4]
        %911 = vst [vmem:[%s910] sm:$0xff] %v909
        %s912 = scalar_lea.vmem [#allocation2], 48
        %v913 = vld [vmem:[%s912] sm:$0xff]
        %914 = vmatprep.subr.mxu0 0.0
        %915 = vmatpush1.msra.mxu0 %v429
        %916 = vmatprep.subr.mxu0 0.0
        %917 = vmatpush1.msra.mxu0 %v430
        %918 = vmatprep.subr.mxu0 0.0
        %919 = vmatpush1.msra.mxu0 %v431
        %920 = vmatprep.subr.mxu0 0.0
        %921 = vmatpush1.msra.mxu0 %v432
        %922 = vmatprep.subr.mxu0 0.0
        %923 = vmatpush1.msra.mxu0 %v433
        %924 = vmatprep.subr.mxu0 0.0
        %925 = vmatpush1.msra.mxu0 %v434
        %926 = vmatprep.subr.mxu0 0.0
        %927 = vmatpush1.msra.mxu0 %v435
        %928 = vmatprep.subr.mxu0 0.0
        %929 = vmatpush1.msra.mxu0 %v436
        %930 = vmatprep.subr.mxu0 0.0
        %931 = vmatpush1.msra.mxu0 %v437
        %932 = vmatprep.subr.mxu0 0.0
        %933 = vmatpush1.msra.mxu0 %v438
        %934 = vmatprep.subr.mxu0 0.0
        %935 = vmatpush1.msra.mxu0 %v439
        %936 = vmatprep.subr.mxu0 0.0
        %937 = vmatpush1.msra.mxu0 %v440
        %938 = vmatprep.subr.mxu0 0.0
        %939 = vmatpush1.msra.mxu0 %v441
        %940 = vmatprep.subr.mxu0 0.0
        %941 = vmatpush1.msra.mxu0 %v442
        %942 = vmatprep.subr.mxu0 0.0
        %943 = vmatpush1.msra.mxu0 %v443
        %944 = vmatprep.subr.mxu0 0.0
        %945 = vmatpush1.msra.mxu0 %v444
        %946 = vmatprep.subr.mxu0 0.0
        %947 = vmatpush1.msra.mxu0 0.0
        %948 = vmatprep.subr.mxu0 0.0
        %949 = vmatpush1.msra.mxu0 0.0
        %950 = vmatprep.subr.mxu0 0.0
        %951 = vmatpush1.msra.mxu0 0.0
        %952 = vmatprep.subr.mxu0 0.0
        %953 = vmatpush1.msra.mxu0 0.0
        %954 = vmatprep.subr.mxu0 0.0
        %955 = vmatpush1.msra.mxu0 0.0
        %956 = vmatprep.subr.mxu0 0.0
        %957 = vmatpush1.msra.mxu0 0.0
        %958 = vmatprep.subr.mxu0 0.0
        %959 = vmatpush1.msra.mxu0 0.0
        %960 = vmatprep.subr.mxu0 0.0
        %961 = vmatpush1.msra.mxu0 0.0
        %962 = vmatprep.subr.mxu0 0.0
        %963 = vmatpush1.msra.mxu0 0.0
        %964 = vmatprep.subr.mxu0 0.0
        %965 = vmatpush1.msra.mxu0 0.0
        %966 = vmatprep.subr.mxu0 0.0
        %967 = vmatpush1.msra.mxu0 0.0
        %968 = vmatprep.subr.mxu0 0.0
        %969 = vmatpush1.msra.mxu0 0.0
        %970 = vmatprep.subr.mxu0 0.0
        %971 = vmatpush1.msra.mxu0 0.0
        %972 = vmatprep.subr.mxu0 0.0
        %973 = vmatpush1.msra.mxu0 0.0
        %974 = vmatprep.subr.mxu0 0.0
        %975 = vmatpush1.msra.mxu0 0.0
        %976 = vmatprep.subr.mxu0 0.0
        %977 = vmatpush1.msra.mxu0 0.0
        %978 = vmatprep.mubr.f32.mxu0 0.0
        %979 = vmatmul.mubr.f32.gmra.mrb[0].mxu0 %v909
        %v980 = vpop.f32.mrb[0].mxu0
        %v981 = vadd.f32 0.0, %v980
        %v982 = vpop.f32.mrb[0].mxu0
        %983 = vdwg.mxu0
        %v984 = vadd.f32 %v913, %v981
        %v985 = vmul.f32 %v909, 0.9
        %v986 = vmax.f32 %v984, 0.0
        %v987 = vadd.f32 %v985, %v986
        %s988 = scalar_lea.vmem %s252, 48 [#allocation4]
        %989 = vst [vmem:[%s988] sm:$0xff] %v987
        %s990 = scalar_lea.vmem [#allocation2], 56
        %v991 = vld [vmem:[%s990] sm:$0xff]
        %992 = vmatprep.subr.mxu0 0.0
        %993 = vmatpush1.msra.mxu0 %v429
        %994 = vmatprep.subr.mxu0 0.0
        %995 = vmatpush1.msra.mxu0 %v430
        %996 = vmatprep.subr.mxu0 0.0
        %997 = vmatpush1.msra.mxu0 %v431
        %998 = vmatprep.subr.mxu0 0.0
        %999 = vmatpush1.msra.mxu0 %v432
        %1000 = vmatprep.subr.mxu0 0.0
        %1001 = vmatpush1.msra.mxu0 %v433
        %1002 = vmatprep.subr.mxu0 0.0
        %1003 = vmatpush1.msra.mxu0 %v434
        %1004 = vmatprep.subr.mxu0 0.0
        %1005 = vmatpush1.msra.mxu0 %v435
        %1006 = vmatprep.subr.mxu0 0.0
        %1007 = vmatpush1.msra.mxu0 %v436
        %1008 = vmatprep.subr.mxu0 0.0
        %1009 = vmatpush1.msra.mxu0 %v437
        %1010 = vmatprep.subr.mxu0 0.0
        %1011 = vmatpush1.msra.mxu0 %v438
        %1012 = vmatprep.subr.mxu0 0.0
        %1013 = vmatpush1.msra.mxu0 %v439
        %1014 = vmatprep.subr.mxu0 0.0
        %1015 = vmatpush1.msra.mxu0 %v440
        %1016 = vmatprep.subr.mxu0 0.0
        %1017 = vmatpush1.msra.mxu0 %v441
        %1018 = vmatprep.subr.mxu0 0.0
        %1019 = vmatpush1.msra.mxu0 %v442
        %1020 = vmatprep.subr.mxu0 0.0
        %1021 = vmatpush1.msra.mxu0 %v443
        %1022 = vmatprep.subr.mxu0 0.0
        %1023 = vmatpush1.msra.mxu0 %v444
        %1024 = vmatprep.subr.mxu0 0.0
        %1025 = vmatpush1.msra.mxu0 0.0
        %1026 = vmatprep.subr.mxu0 0.0
        %1027 = vmatpush1.msra.mxu0 0.0
        %1028 = vmatprep.subr.mxu0 0.0
        %1029 = vmatpush1.msra.mxu0 0.0
        %1030 = vmatprep.subr.mxu0 0.0
        %1031 = vmatpush1.msra.mxu0 0.0
        %1032 = vmatprep.subr.mxu0 0.0
        %1033 = vmatpush1.msra.mxu0 0.0
        %1034 = vmatprep.subr.mxu0 0.0
        %1035 = vmatpush1.msra.mxu0 0.0
        %1036 = vmatprep.subr.mxu0 0.0
        %1037 = vmatpush1.msra.mxu0 0.0
        %1038 = vmatprep.subr.mxu0 0.0
        %1039 = vmatpush1.msra.mxu0 0.0
        %1040 = vmatprep.subr.mxu0 0.0
        %1041 = vmatpush1.msra.mxu0 0.0
        %1042 = vmatprep.subr.mxu0 0.0
        %1043 = vmatpush1.msra.mxu0 0.0
        %1044 = vmatprep.subr.mxu0 0.0
        %1045 = vmatpush1.msra.mxu0 0.0
        %1046 = vmatprep.subr.mxu0 0.0
        %1047 = vmatpush1.msra.mxu0 0.0
        %1048 = vmatprep.subr.mxu0 0.0
        %1049 = vmatpush1.msra.mxu0 0.0
        %1050 = vmatprep.subr.mxu0 0.0
        %1051 = vmatpush1.msra.mxu0 0.0
        %1052 = vmatprep.subr.mxu0 0.0
        %1053 = vmatpush1.msra.mxu0 0.0
        %1054 = vmatprep.subr.mxu0 0.0
        %1055 = vmatpush1.msra.mxu0 0.0
        %1056 = vmatprep.mubr.f32.mxu0 0.0
        %1057 = vmatmul.mubr.f32.gmra.mrb[0].mxu0 %v987
        %v1058 = vpop.f32.mrb[0].mxu0
        %v1059 = vadd.f32 0.0, %v1058
        %v1060 = vpop.f32.mrb[0].mxu0
        %1061 = vdwg.mxu0
        %v1062 = vadd.f32 %v991, %v1059
        %v1063 = vmul.f32 %v987, 0.9
        %v1064 = vmax.f32 %v1062, 0.0
        %v1065 = vadd.f32 %v1063, %v1064
        %s1066 = scalar_lea.vmem %s252, 56 [#allocation4]
        %1067 = vst [vmem:[%s1066] sm:$0xff] %v1065
        %1068 = vst [vmem:[#allocation3] sm:$0xff] %v1065
        %s1069 = sand.u32 %s158, 1
        %s1070 = scalar_lea.sflag [#allocation5], %s1069
        %s1071 = sand.u32 %s158, 1
        %s1072 = smul.addr %s1071, 64
        %s1073 = scalar_lea.vmem [#allocation4], %s1072
        // Predicated region
        $region45: #{tpu_custom_call.1} parent=39 // pred_check
          %p1074 = pneg %p168
        $region46: #{tpu_custom_call.1} parent=39 // pred_check_branch
          %1076 = sbr.rel (%p1074) target = $region48
        $region47: #{tpu_custom_call.1} parent=39 // pred_region
          %s1078 = ssub.s32 1024, 1024
          %1079 = vsyncadd %s1070, %s1078
          %s1080 = smul.addr %s24, 8
          %s1081 = sadd.s32 %s23, %s1080
          %s1082 = smul.addr %s1081, 128
          %s1083 = scalar_lea.hbm %s5, %s1082
          %s1084 = sshll.u32 %s1073, 4
          %s1085 = int_to_ptr.vmem [resolvable:$true] %s1084
          %1090 = dma.vmem_to_hbm [thread:$0]  %s1085, 1024, %s1083, %s1070, 128, 128, 8
        $region48: #{tpu_custom_call.1} parent=39 // pred_fallthru
          _
      $region40: #{tpu_custom_call.1} parent=5 // pred_fallthru
        _
      %p1091 = scmp.le.s32.totalorder 2, %s14
      // Predicated region
      $region49: #{tpu_custom_call.1} parent=5 // pred_check
        %p1092 = pneg %p1091
      $region50: #{tpu_custom_call.1} parent=5 // pred_check_branch
        %1094 = sbr.rel (%p1092) target = $region52
      $region51: #{tpu_custom_call.1} parent=5 // pred_region
        %s1095 = ssub.s32 %s14, 2
        // Predicated region
        $region53: #{tpu_custom_call.1} parent=51 // pred_check
          %p1096 = pneg %p174
        $region54: #{tpu_custom_call.1} parent=51 // pred_check_branch
          %1098 = sbr.rel (%p1096) target = $region56
        $region55: #{tpu_custom_call.1} parent=51 // pred_region
          %s1099 = sand.u32 %s159, 1
          %s1100 = scalar_lea.sflag [#allocation5], %s1099
          %s1101 = sand.u32 %s159, 1
          %s1102 = smul.addr %s1101, 64
          %s1103 = scalar_lea.vmem [#allocation4], %s1102
          %1104 = dma.done %s1100, 1024
        $region56: #{tpu_custom_call.1} parent=51 // pred_fallthru
          _
      $region52: #{tpu_custom_call.1} parent=5 // pred_fallthru
        _
    $region6: #{tpu_custom_call.1} parent=1 // loop_footer
      %s18 = sadd.s32 1, %s14
    $region7: #{tpu_custom_call.1} parent=1 // loop_footer_branch
      %13 = sbr.rel target = $region3
    $region8: #{tpu_custom_call.1} parent=1 // loop_exit
      _
    %1105 = vsyncpa [#allocation5], 1
    %s1106 = scalar_lea.sflag [#allocation5], 1
    %1107 = vsyncpa %s1106, 1

// kernel: tpu_custom_call.1
$region0: #{tpu_custom_call.1}
  #allocation0 [shape = 'u32[]', space=smem, size = 0x4, offset = 0x4, fixed_abs, tag = 'smem constant byte address 0x4 - core index']
  #allocation1 [shape = 'u32[144,128]{1,0:T(1,128)}', space=vmem, size = 0x12000, scoped, tag = 'internal scratch']
  #allocation2 [shape = 'f32[8,8,128]{2,1,0:T(8,128)}', space=vmem, size = 0x8000, scoped, tag = 'scratch operand']
  #allocation3 [shape = 'f32[8,128]{1,0:T(8,128)}', space=vmem, size = 0x1000, scoped, tag = 'scratch operand']
  %s0 = inlined_call_operand.vmem [shape: f32[2,8,8,4], index: 0, kind: input, shape index: {}]
  %s1 = inlined_call_operand.vmem [shape: f32[4,128], index: 1, kind: input, shape index: {}]
  %s2 = inlined_call_operand.vmem [shape: f32[128,128], index: 2, kind: input, shape index: {}]
  %s3 = inlined_call_operand.vmem [shape: f32[1,128], index: 3, kind: input, shape index: {}]
  %s4 = inlined_call_operand.vmem [shape: f32[8,128], index: 4, kind: input, shape index: {}]
  %s5 = inlined_call_operand.hbm [shape: f32[2,8,8,128], index: 5, kind: output, shape index: {}]
  %s6 = sld [smem:[#allocation0]]
  $region57: #{tpu_custom_call.1} parent=0
    _
  %s8 = ssub.s32 1, %s6
  %s9 = scalar_select 0, %s8, %s6
  $region1: #{tpu_custom_call.1} parent=0
    #allocation4 [shape = 'u8[65536]{0}', space=vmem, size = 0x10000, scoped, tag = 'output window, operand 0']
    #allocation5 [shape = 's32[2]{0}', space=sflag, size = 0x8, scoped, tag = 'scoped memory for tpu_custom_call.1']
    %10 = vsyncpa [#allocation5], 0
    %s11 = scalar_lea.sflag [#allocation5], 1
    %12 = vsyncpa %s11, 0
    loop: start=0, step=1, limit=4
    $region2: #{tpu_custom_call.1} parent=1 // loop_pre_header
      _
    $region3: #{tpu_custom_call.1} parent=1 // loop_header
      %s14 = sphi 0, %s18
      %p15 = scmp.ge.s32.totalorder %s14, 4
      %s21 = sphi 0, %s33
      %s22 = sphi 0, %s29
      %s23 = sphi 0, %s21
      %s24 = sphi 0, %s22
      %s25 = sphi 0, %s23
      %s26 = sphi 0, %s24
      %s38 = sphi 0, %s40
      %s41 = sphi 0, %s38
      %s42 = sphi 0, %s41
      %s58 = sphi 0, %s42
      %s62 = sphi 0, %s62
      %s64 = sphi 0, %s62
      %s65 = sphi 0, %s64
      %s79 = sphi 0, %s65
      %s83 = sphi 0, %s83
      %s85 = sphi 0, %s83
      %s86 = sphi 0, %s85
      %s100 = sphi 0, %s86
      %s104 = sphi 0, %s104
      %s106 = sphi 0, %s104
      %s107 = sphi 0, %s106
      %s121 = sphi 0, %s107
      %s127 = sphi 0, %s129
      %s130 = sphi 0, %s127
      %s131 = sphi 0, %s130
      %s147 = sphi 0, %s131
      %s155 = sphi 0, %s157
      %s158 = sphi 0, %s155
      %s159 = sphi 0, %s158
      %s175 = sphi 0, %s159
    $region4: #{tpu_custom_call.1} parent=1 // loop_header_branch
      %17 = sbr.rel (%p15) target = $region8
    $region5: #{tpu_custom_call.1} parent=1 // loop_body
      %s19 = ssub.s32 %s14, 1
      %s20 = ssub.s32 %s14, 2
      %s27 = sadd.s32 1, %s22
      %p28 = scmp.ge.s32.totalorder %s27, 2
      %s29 = scalar_select %p28, 0, %s27
      %s30 = sadd.s32 1, %s21
      %s31 = scalar_select %p28, %s30, %s21
      %p32 = scmp.ge.s32.totalorder %s31, 1
      %s33 = scalar_select %p32, 0, %s31
      %s34 = ssub.s32 %s22, %s29
      %s35 = ssub.s32 %s21, %s33
      %s36 = sor.u32 %s34, %s35
      %p37 = scmp.eq.s32.totalorder %s36, 0
      %s39 = sadd.s32 %s38, 1
      %s40 = scalar_select %p37, %s38, %s39
      %p43 = pneg %p37
      %p44 = scmp.eq.s32.totalorder %s14, 1
      %p45 = por %p43, %p44
      %p46 = scmp.ne.s32.totalorder %s38, %s41
      %p47 = scmp.eq.s32.totalorder %s14, 0
      %p48 = por %p46, %p47
      %p49 = scmp.ne.s32.totalorder %s38, %s41
      %p50 = scmp.eq.s32.totalorder %s19, 1
      %p51 = por %p49, %p50
      %p52 = scmp.ne.s32.totalorder %s41, %s42
      %p53 = scmp.eq.s32.totalorder %s19, 0
      %p54 = por %p52, %p53
      %p55 = scmp.ne.s32.totalorder %s41, %s42
      %p56 = scmp.eq.s32.totalorder %s20, 1
      %p57 = por %p55, %p56
      %p59 = scmp.ne.s32.totalorder %s42, %s58
      %p60 = scmp.eq.s32.totalorder %s20, 0
      %p61 = por %p59, %p60
      %s63 = sadd.s32 %s62, 1
      %p66 = scmp.eq.s32.totalorder %s14, 1
      %p67 = scmp.ne.s32.totalorder %s62, %s64
      %p68 = scmp.eq.s32.totalorder %s14, 0
      %p69 = por %p67, %p68
      %p70 = scmp.ne.s32.totalorder %s62, %s64
      %p71 = scmp.eq.s32.totalorder %s19, 1
      %p72 = por %p70, %p71
      %p73 = scmp.ne.s32.totalorder %s64, %s65
      %p74 = scmp.eq.s32.totalorder %s19, 0
      %p75 = por %p73, %p74
      %p76 = scmp.ne.s32.totalorder %s64, %s65
      %p77 = scmp.eq.s32.totalorder %s20, 1
      %p78 = por %p76, %p77
      %p80 = scmp.ne.s32.totalorder %s65, %s79
      %p81 = scmp.eq.s32.totalorder %s20, 0
      %p82 = por %p80, %p81
      %s84 = sadd.s32 %s83, 1
      %p87 = scmp.eq.s32.totalorder %s14, 1
      %p88 = scmp.ne.s32.totalorder %s83, %s85
      %p89 = scmp.eq.s32.totalorder %s14, 0
      %p90 = por %p88, %p89
      %p91 = scmp.ne.s32.totalorder %s83, %s85
      %p92 = scmp.eq.s32.totalorder %s19, 1
      %p93 = por %p91, %p92
      %p94 = scmp.ne.s32.totalorder %s85, %s86
      %p95 = scmp.eq.s32.totalorder %s19, 0
      %p96 = por %p94, %p95
      %p97 = scmp.ne.s32.totalorder %s85, %s86
      %p98 = scmp.eq.s32.totalorder %s20, 1
      %p99 = por %p97, %p98
      %p101 = scmp.ne.s32.totalorder %s86, %s100
      %p102 = scmp.eq.s32.totalorder %s20, 0
      %p103 = por %p101, %p102
      %s105 = sadd.s32 %s104, 1
      %p108 = scmp.eq.s32.totalorder %s14, 1
      %p109 = scmp.ne.s32.totalorder %s104, %s106
      %p110 = scmp.eq.s32.totalorder %s14, 0
      %p111 = por %p109, %p110
      %p112 = scmp.ne.s32.totalorder %s104, %s106
      %p113 = scmp.eq.s32.totalorder %s19, 1
      %p114 = por %p112, %p113
      %p115 = scmp.ne.s32.totalorder %s106, %s107
      %p116 = scmp.eq.s32.totalorder %s19, 0
      %p117 = por %p115, %p116
      %p118 = scmp.ne.s32.totalorder %s106, %s107
      %p119 = scmp.eq.s32.totalorder %s20, 1
      %p120 = por %p118, %p119
      %p122 = scmp.ne.s32.totalorder %s107, %s121
      %p123 = scmp.eq.s32.totalorder %s20, 0
      %p124 = por %p122, %p123
      %s125 = ssub.s32 %s21, %s33
      %p126 = scmp.eq.s32.totalorder %s125, 0
      %s128 = sadd.s32 %s127, 1
      %s129 = scalar_select %p126, %s127, %s128
      %p132 = pneg %p126
      %p133 = scmp.eq.s32.totalorder %s14, 1
      %p134 = por %p132, %p133
      %p135 = scmp.ne.s32.totalorder %s127, %s130
      %p136 = scmp.eq.s32.totalorder %s14, 0
      %p137 = por %p135, %p136
      %p138 = scmp.ne.s32.totalorder %s127, %s130
      %p139 = scmp.eq.s32.totalorder %s19, 1
      %p140 = por %p138, %p139
      %p141 = scmp.ne.s32.totalorder %s130, %s131
      %p142 = scmp.eq.s32.totalorder %s19, 0
      %p143 = por %p141, %p142
      %p144 = scmp.ne.s32.totalorder %s130, %s131
      %p145 = scmp.eq.s32.totalorder %s20, 1
      %p146 = por %p144, %p145
      %p148 = scmp.ne.s32.totalorder %s131, %s147
      %p149 = scmp.eq.s32.totalorder %s20, 0
      %p150 = por %p148, %p149
      %s151 = ssub.s32 %s22, %s29
      %s152 = ssub.s32 %s21, %s33
      %s153 = sor.u32 %s151, %s152
      %p154 = scmp.eq.s32.totalorder %s153, 0
      %s156 = sadd.s32 %s155, 1
      %s157 = scalar_select %p154, %s155, %s156
      %p160 = pneg %p154
      %p161 = scmp.eq.s32.totalorder %s14, 1
      %p162 = por %p160, %p161
      %p163 = scmp.ne.s32.totalorder %s155, %s158
      %p164 = scmp.eq.s32.totalorder %s14, 0
      %p165 = por %p163, %p164
      %p166 = scmp.ne.s32.totalorder %s155, %s158
      %p167 = scmp.eq.s32.totalorder %s19, 1
      %p168 = por %p166, %p167
      %p169 = scmp.ne.s32.totalorder %s158, %s159
      %p170 = scmp.eq.s32.totalorder %s19, 0
      %p171 = por %p169, %p170
      %p172 = scmp.ne.s32.totalorder %s158, %s159
      %p173 = scmp.eq.s32.totalorder %s20, 1
      %p174 = por %p172, %p173
      %p176 = scmp.ne.s32.totalorder %s159, %s175
      %p177 = scmp.eq.s32.totalorder %s20, 0
      %p178 = por %p176, %p177
      %p179 = scmp.le.s32.totalorder 1, %s14
      %p180 = scmp.lt.s32.totalorder %s14, 3
      %p181 = pnand %p179, %p180
      %p182 = pneg %p181
      // Predicated region
      $region9: #{tpu_custom_call.1} parent=5 // pred_check
        _
      $region10: #{tpu_custom_call.1} parent=5 // pred_check_branch
        %184 = sbr.rel (%p181) target = $region12
      $region11: #{tpu_custom_call.1} parent=5 // pred_region
        %s185 = ssub.s32 %s14, 1
        // Predicated region
        $region13: #{tpu_custom_call.1} parent=11 // pred_check
          %p186 = pneg %p75
        $region14: #{tpu_custom_call.1} parent=11 // pred_check_branch
          %188 = sbr.rel (%p186) target = $region16
        $region15: #{tpu_custom_call.1} parent=11 // pred_region
          _
        $region16: #{tpu_custom_call.1} parent=11 // pred_fallthru
          _
        // Predicated region
        $region17: #{tpu_custom_call.1} parent=11 // pred_check
          %p189 = pneg %p96
        $region18: #{tpu_custom_call.1} parent=11 // pred_check_branch
          %191 = sbr.rel (%p189) target = $region20
        $region19: #{tpu_custom_call.1} parent=11 // pred_region
          _
        $region20: #{tpu_custom_call.1} parent=11 // pred_fallthru
          _
        // Predicated region
        $region21: #{tpu_custom_call.1} parent=11 // pred_check
          %p192 = pneg %p117
        $region22: #{tpu_custom_call.1} parent=11 // pred_check_branch
          %194 = sbr.rel (%p192) target = $region24
        $region23: #{tpu_custom_call.1} parent=11 // pred_region
          _
        $region24: #{tpu_custom_call.1} parent=11 // pred_fallthru
          _
        // Predicated region
        $region25: #{tpu_custom_call.1} parent=11 // pred_check
          %p195 = pneg %p143
        $region26: #{tpu_custom_call.1} parent=11 // pred_check_branch
          %197 = sbr.rel (%p195) target = $region28
        $region27: #{tpu_custom_call.1} parent=11 // pred_region
          %p198 = scmp.lt.s32.totalorder %s23, 0
          %s199 = scalar_select %p198, %s23, 0
          %s200 = smul.addr %s199, 8
          %s201 = scalar_lea.vmem %s4, %s200
        $region28: #{tpu_custom_call.1} parent=11 // pred_fallthru
          _
      $region12: #{tpu_custom_call.1} parent=5 // pred_fallthru
        _
      %p202 = scmp.lt.s32.totalorder %s14, 2
      // Predicated region
      $region29: #{tpu_custom_call.1} parent=5 // pred_check
        %p203 = pneg %p202
      $region30: #{tpu_custom_call.1} parent=5 // pred_check_branch
        %205 = sbr.rel (%p203) target = $region32
      $region31: #{tpu_custom_call.1} parent=5 // pred_region
        // Predicated region
        $region33: #{tpu_custom_call.1} parent=31 // pred_check
          %p206 = pneg %p48
        $region34: #{tpu_custom_call.1} parent=31 // pred_check_branch
          %208 = sbr.rel (%p206) target = $region36
        $region35: #{tpu_custom_call.1} parent=31 // pred_region
          %p209 = scmp.lt.s32.totalorder %s22, 1
          %s210 = scalar_select %p209, %s22, 1
          %p211 = scmp.lt.s32.totalorder %s21, 0
          %s212 = scalar_select %p211, %s21, 0
          %s213 = smul.addr %s210, 8
          %s214 = sadd.s32 %s212, %s213
          %s215 = smul.addr %s214, 8
          %s216 = scalar_lea.vmem %s0, %s215
        $region36: #{tpu_custom_call.1} parent=31 // pred_fallthru
          _
      $region32: #{tpu_custom_call.1} parent=5 // pred_fallthru
        _
      %p217 = scmp.le.s32.totalorder 1, %s14
      %p218 = scmp.lt.s32.totalorder %s14, 3
      %p219 = pnand %p217, %p218
      %p220 = pneg %p219
      // Predicated region
      $region37: #{tpu_custom_call.1} parent=5 // pred_check
        _
      $region38: #{tpu_custom_call.1} parent=5 // pred_check_branch
        %222 = sbr.rel (%p219) target = $region40
      $region39: #{tpu_custom_call.1} parent=5 // pred_region
        %s223 = ssub.s32 %s14, 1
        %p224 = scmp.lt.s32.totalorder %s24, 1
        %s225 = scalar_select %p224, %s24, 1
        %p226 = scmp.lt.s32.totalorder %s23, 0
        %s227 = scalar_select %p226, %s23, 0
        %s228 = smul.addr %s225, 8
        %s229 = sadd.s32 %s227, %s228
        %s230 = smul.addr %s229, 8
        %s231 = scalar_lea.vmem %s0, %s230
        %p232 = pneg %p54
        %p233 = pneg %p51
        %p234 = pneg %p75
        %p235 = pneg %p72
        %p236 = pneg %p96
        %p237 = pneg %p93
        %p238 = pneg %p117
        %p239 = pneg %p114
        %p240 = scmp.lt.s32.totalorder %s23, 0
        %s241 = scalar_select %p240, %s23, 0
        %s242 = smul.addr %s241, 8
        %s243 = scalar_lea.vmem %s4, %s242
        %p244 = pneg %p143
        %p245 = pneg %p140
        %p246 = pneg %p171
        %p247 = pneg %p168
        %s248 = sand.u32 %s158, 1
        %s249 = scalar_lea.sflag [#allocation5], %s248
        %s250 = sand.u32 %s158, 1
        %s251 = smul.addr %s250, 64
        %s252 = scalar_lea.vmem [#allocation4], %s251
        %p253 = scmp.lt.s32.totalorder %s24, 1
        %s254 = scalar_select %p253, %s24, 1
        %p255 = scmp.lt.s32.totalorder %s23, 0
        %s256 = scalar_select %p255, %s23, 0
        %s257 = smul.addr %s254, 8
        %s258 = sadd.s32 %s256, %s257
        %s259 = smul.addr %s258, 8
        %s260 = scalar_lea.vmem %s0, %s259
        %p261 = scmp.lt.s32.totalorder %s23, 0
        %s262 = scalar_select %p261, %s23, 0
        %s263 = smul.addr %s262, 8
        %s264 = scalar_lea.vmem %s4, %s263
        %p265 = scmp.eq.s32.totalorder %s24, 0
        // Predicated region
        $region41: #{tpu_custom_call.1} parent=39 // pred_check
          %p266 = pneg %p265
        $region42: #{tpu_custom_call.1} parent=39 // pred_check_branch
          %268 = sbr.rel (%p266) target = $region44
        $region43: #{tpu_custom_call.1} parent=39 // pred_region
          %v269 = vld [vmem:[%s264] sm:$0xff]
          %270 = vst [vmem:[#allocation3] sm:$0xff] %v269
        $region44: #{tpu_custom_call.1} parent=39 // pred_fallthru
          _
        %v271 = vld [vmem:[%s260] sm:$0xff]
        %v272 = vld [vmem:[%s260 + $0x8] sm:$0xff]
        %v273 = vld [vmem:[%s260 + $0x10] sm:$0xff]
        %v274 = vld [vmem:[%s260 + $0x18] sm:$0xff]
        %v275 = vld [vmem:[%s260 + $0x20] sm:$0xff]
        %v276 = vld [vmem:[%s260 + $0x28] sm:$0xff]
        %v277 = vld [vmem:[%s260 + $0x30] sm:$0xff]
        %v278 = vld [vmem:[%s260 + $0x38] sm:$0xff]
        %v279 = vld [vmem:[%s1] sm:$0xf]
        %v280 = vld [vmem:[%s3] sm:$0x1]
        %v282 = vlaneseq
        %v283 = vshrl.u32 %v282, 7
        %v284 = vsub.s32 0, %v283
        %v285 = vrot.slane %v280, %v284
        %vm287 = vcmask 31744
        %v289 = vsel %vm287, %v271, 0
        %v292 = vsel %vm287, %v272, 0
        %v295 = vsel %vm287, %v273, 0
        %v298 = vsel %vm287, %v274, 0
        %v301 = vsel %vm287, %v275, 0
        %v304 = vsel %vm287, %v276, 0
        %v307 = vsel %vm287, %v277, 0
        %v310 = vsel %vm287, %v278, 0
        %vm312 = vcmask 1043456
        %v314 = vsel %vm312, %v279, 0
        %316 = vmatprep.subr.mxu0 0.0
        %317 = vmatpush1.msra.mxu0 %v314
        %318 = vmatprep.subr.mxu0 0.0
        %319 = vmatpush1.msra.mxu0 0.0
        %320 = vmatprep.subr.mxu0 0.0
        %321 = vmatpush1.msra.mxu0 0.0
        %322 = vmatprep.subr.mxu0 0.0
        %323 = vmatpush1.msra.mxu0 0.0
        %324 = vmatprep.subr.mxu0 0.0
        %325 = vmatpush1.msra.mxu0 0.0
        %326 = vmatprep.subr.mxu0 0.0
        %327 = vmatpush1.msra.mxu0 0.0
        %328 = vmatprep.subr.mxu0 0.0
        %329 = vmatpush1.msra.mxu0 0.0
        %330 = vmatprep.subr.mxu0 0.0
        %331 = vmatpush1.msra.mxu0 0.0
        %332 = vmatprep.subr.mxu0 0.0
        %333 = vmatpush1.msra.mxu0 0.0
        %334 = vmatprep.subr.mxu0 0.0
        %335 = vmatpush1.msra.mxu0 0.0
        %336 = vmatprep.subr.mxu0 0.0
        %337 = vmatpush1.msra.mxu0 0.0
        %338 = vmatprep.subr.mxu0 0.0
        %339 = vmatpush1.msra.mxu0 0.0
        %340 = vmatprep.subr.mxu0 0.0
        %341 = vmatpush1.msra.mxu0 0.0
        %342 = vmatprep.subr.mxu0 0.0
        %343 = vmatpush1.msra.mxu0 0.0
        %344 = vmatprep.subr.mxu0 0.0
        %345 = vmatpush1.msra.mxu0 0.0
        %346 = vmatprep.subr.mxu0 0.0
        %347 = vmatpush1.msra.mxu0 0.0
        %348 = vmatprep.subr.mxu0 0.0
        %349 = vmatpush1.msra.mxu0 0.0
        %350 = vmatprep.subr.mxu0 0.0
        %351 = vmatpush1.msra.mxu0 0.0
        %352 = vmatprep.subr.mxu0 0.0
        %353 = vmatpush1.msra.mxu0 0.0
        %354 = vmatprep.subr.mxu0 0.0
        %355 = vmatpush1.msra.mxu0 0.0
        %356 = vmatprep.subr.mxu0 0.0
        %357 = vmatpush1.msra.mxu0 0.0
        %358 = vmatprep.subr.mxu0 0.0
        %359 = vmatpush1.msra.mxu0 0.0
        %360 = vmatprep.subr.mxu0 0.0
        %361 = vmatpush1.msra.mxu0 0.0
        %362 = vmatprep.subr.mxu0 0.0
        %363 = vmatpush1.msra.mxu0 0.0
        %364 = vmatprep.subr.mxu0 0.0
        %365 = vmatpush1.msra.mxu0 0.0
        %366 = vmatprep.subr.mxu0 0.0
        %367 = vmatpush1.msra.mxu0 0.0
        %368 = vmatprep.subr.mxu0 0.0
        %369 = vmatpush1.msra.mxu0 0.0
        %370 = vmatprep.subr.mxu0 0.0
        %371 = vmatpush1.msra.mxu0 0.0
        %372 = vmatprep.subr.mxu0 0.0
        %373 = vmatpush1.msra.mxu0 0.0
        %374 = vmatprep.subr.mxu0 0.0
        %375 = vmatpush1.msra.mxu0 0.0
        %376 = vmatprep.subr.mxu0 0.0
        %377 = vmatpush1.msra.mxu0 0.0
        %378 = vmatprep.subr.mxu0 0.0
        %379 = vmatpush1.msra.mxu0 0.0
        %380 = vmatprep.mubr.f32.mxu0 0.0
        %381 = vmatmul.mubr.f32.gmra.mrb[0].mxu0 %v289
        %v382 = vpop.f32.mrb[0].mxu0
        %v383 = vadd.f32 %v285, %v382
        %v384 = vpop.f32.mrb[0].mxu0
        %385 = vmatprep.mubr.f32.mxu0 0.0
        %386 = vmatmul.mubr.f32.gmra.mrb[0].mxu0 %v292
        %v387 = vpop.f32.mrb[0].mxu0
        %v388 = vadd.f32 %v285, %v387
        %v389 = vpop.f32.mrb[0].mxu0
        %390 = vmatprep.mubr.f32.mxu0 0.0
        %391 = vmatmul.mubr.f32.gmra.mrb[0].mxu0 %v295
        %v392 = vpop.f32.mrb[0].mxu0
        %v393 = vadd.f32 %v285, %v392
        %v394 = vpop.f32.mrb[0].mxu0
        %395 = vmatprep.mubr.f32.mxu0 0.0
        %396 = vmatmul.mubr.f32.gmra.mrb[0].mxu0 %v298
        %v397 = vpop.f32.mrb[0].mxu0
        %v398 = vadd.f32 %v285, %v397
        %v399 = vpop.f32.mrb[0].mxu0
        %400 = vmatprep.mubr.f32.mxu0 0.0
        %401 = vmatmul.mubr.f32.gmra.mrb[0].mxu0 %v301
        %v402 = vpop.f32.mrb[0].mxu0
        %v403 = vadd.f32 %v285, %v402
        %v404 = vpop.f32.mrb[0].mxu0
        %405 = vmatprep.mubr.f32.mxu0 0.0
        %406 = vmatmul.mubr.f32.gmra.mrb[0].mxu0 %v304
        %v407 = vpop.f32.mrb[0].mxu0
        %v408 = vadd.f32 %v285, %v407
        %v409 = vpop.f32.mrb[0].mxu0
        %410 = vmatprep.mubr.f32.mxu0 0.0
        %411 = vmatmul.mubr.f32.gmra.mrb[0].mxu0 %v307
        %v412 = vpop.f32.mrb[0].mxu0
        %v413 = vadd.f32 %v285, %v412
        %v414 = vpop.f32.mrb[0].mxu0
        %415 = vmatprep.mubr.f32.mxu0 0.0
        %416 = vmatmul.mubr.f32.gmra.mrb[0].mxu0 %v310
        %v417 = vpop.f32.mrb[0].mxu0
        %v418 = vadd.f32 %v285, %v417
        %v419 = vpop.f32.mrb[0].mxu0
        %420 = vdwg.mxu0
        %421 = vst [vmem:[#allocation2] sm:$0xff] %v383
        %422 = vst [vmem:[#allocation2 + $0x8] sm:$0xff] %v388
        %423 = vst [vmem:[#allocation2 + $0x10] sm:$0xff] %v393
        %424 = vst [vmem:[#allocation2 + $0x18] sm:$0xff] %v398
        %425 = vst [vmem:[#allocation2 + $0x20] sm:$0xff] %v403
        %426 = vst [vmem:[#allocation2 + $0x28] sm:$0xff] %v408
        %427 = vst [vmem:[#allocation2 + $0x30] sm:$0xff] %v413
        %428 = vst [vmem:[#allocation2 + $0x38] sm:$0xff] %v418
        %v429 = vld [vmem:[%s2] sm:$0xff]
        %v430 = vld [vmem:[%s2 + $0x8] sm:$0xff]
        %v431 = vld [vmem:[%s2 + $0x10] sm:$0xff]
        %v432 = vld [vmem:[%s2 + $0x18] sm:$0xff]
        %v433 = vld [vmem:[%s2 + $0x20] sm:$0xff]
        %v434 = vld [vmem:[%s2 + $0x28] sm:$0xff]
        %v435 = vld [vmem:[%s2 + $0x30] sm:$0xff]
        %v436 = vld [vmem:[%s2 + $0x38] sm:$0xff]
        %v437 = vld [vmem:[%s2 + $0x40] sm:$0xff]
        %v438 = vld [vmem:[%s2 + $0x48] sm:$0xff]
        %v439 = vld [vmem:[%s2 + $0x50] sm:$0xff]
        %v440 = vld [vmem:[%s2 + $0x58] sm:$0xff]
        %v441 = vld [vmem:[%s2 + $0x60] sm:$0xff]
        %v442 = vld [vmem:[%s2 + $0x68] sm:$0xff]
        %v443 = vld [vmem:[%s2 + $0x70] sm:$0xff]
        %v444 = vld [vmem:[%s2 + $0x78] sm:$0xff]
        %v445 = vld [vmem:[#allocation3] sm:$0xff]
        %v446 = vld [vmem:[#allocation2] sm:$0xff]
        %447 = vmatprep.subr.mxu0 0.0
        %448 = vmatpush1.msra.mxu0 %v429
        %449 = vmatprep.subr.mxu0 0.0
        %450 = vmatpush1.msra.mxu0 %v430
        %451 = vmatprep.subr.mxu0 0.0
        %452 = vmatpush1.msra.mxu0 %v431
        %453 = vmatprep.subr.mxu0 0.0
        %454 = vmatpush1.msra.mxu0 %v432
        %455 = vmatprep.subr.mxu0 0.0
        %456 = vmatpush1.msra.mxu0 %v433
        %457 = vmatprep.subr.mxu0 0.0
        %458 = vmatpush1.msra.mxu0 %v434
        %459 = vmatprep.subr.mxu0 0.0
        %460 = vmatpush1.msra.mxu0 %v435
        %461 = vmatprep.subr.mxu0 0.0
        %462 = vmatpush1.msra.mxu0 %v436
        %463 = vmatprep.subr.mxu0 0.0
        %464 = vmatpush1.msra.mxu0 %v437
        %465 = vmatprep.subr.mxu0 0.0
        %466 = vmatpush1.msra.mxu0 %v438
        %467 = vmatprep.subr.mxu0 0.0
        %468 = vmatpush1.msra.mxu0 %v439
        %469 = vmatprep.subr.mxu0 0.0
        %470 = vmatpush1.msra.mxu0 %v440
        %471 = vmatprep.subr.mxu0 0.0
        %472 = vmatpush1.msra.mxu0 %v441
        %473 = vmatprep.subr.mxu0 0.0
        %474 = vmatpush1.msra.mxu0 %v442
        %475 = vmatprep.subr.mxu0 0.0
        %476 = vmatpush1.msra.mxu0 %v443
        %477 = vmatprep.subr.mxu0 0.0
        %478 = vmatpush1.msra.mxu0 %v444
        %479 = vmatprep.subr.mxu0 0.0
        %480 = vmatpush1.msra.mxu0 0.0
        %481 = vmatprep.subr.mxu0 0.0
        %482 = vmatpush1.msra.mxu0 0.0
        %483 = vmatprep.subr.mxu0 0.0
        %484 = vmatpush1.msra.mxu0 0.0
        %485 = vmatprep.subr.mxu0 0.0
        %486 = vmatpush1.msra.mxu0 0.0
        %487 = vmatprep.subr.mxu0 0.0
        %488 = vmatpush1.msra.mxu0 0.0
        %489 = vmatprep.subr.mxu0 0.0
        %490 = vmatpush1.msra.mxu0 0.0
        %491 = vmatprep.subr.mxu0 0.0
        %492 = vmatpush1.msra.mxu0 0.0
        %493 = vmatprep.subr.mxu0 0.0
        %494 = vmatpush1.msra.mxu0 0.0
        %495 = vmatprep.subr.mxu0 0.0
        %496 = vmatpush1.msra.mxu0 0.0
        %497 = vmatprep.subr.mxu0 0.0
        %498 = vmatpush1.msra.mxu0 0.0
        %499 = vmatprep.subr.mxu0 0.0
        %500 = vmatpush1.msra.mxu0 0.0
        %501 = vmatprep.subr.mxu0 0.0
        %502 = vmatpush1.msra.mxu0 0.0
        %503 = vmatprep.subr.mxu0 0.0
        %504 = vmatpush1.msra.mxu0 0.0
        %505 = vmatprep.subr.mxu0 0.0
        %506 = vmatpush1.msra.mxu0 0.0
        %507 = vmatprep.subr.mxu0 0.0
        %508 = vmatpush1.msra.mxu0 0.0
        %509 = vmatprep.subr.mxu0 0.0
        %510 = vmatpush1.msra.mxu0 0.0
        %511 = vmatprep.mubr.f32.mxu0 0.0
        %512 = vmatmul.mubr.f32.gmra.mrb[0].mxu0 %v445
        %v513 = vpop.f32.mrb[0].mxu0
        %v514 = vadd.f32 0.0, %v513
        %v515 = vpop.f32.mrb[0].mxu0
        %516 = vdwg.mxu0
        %v517 = vadd.f32 %v446, %v514
        %v518 = vmul.f32 %v445, 0.9
        %v519 = vmax.f32 %v517, 0.0
        %v520 = vadd.f32 %v518, %v519
        %521 = vst [vmem:[%s252] sm:$0xff] %v520
        %s522 = scalar_lea.vmem [#allocation2], 8
        %v523 = vld [vmem:[%s522] sm:$0xff]
        %524 = vmatprep.subr.mxu0 0.0
        %525 = vmatpush1.msra.mxu0 %v429
        %526 = vmatprep.subr.mxu0 0.0
        %527 = vmatpush1.msra.mxu0 %v430
        %528 = vmatprep.subr.mxu0 0.0
        %529 = vmatpush1.msra.mxu0 %v431
        %530 = vmatprep.subr.mxu0 0.0
        %531 = vmatpush1.msra.mxu0 %v432
        %532 = vmatprep.subr.mxu0 0.0
        %533 = vmatpush1.msra.mxu0 %v433
        %534 = vmatprep.subr.mxu0 0.0
        %535 = vmatpush1.msra.mxu0 %v434
        %536 = vmatprep.subr.mxu0 0.0
        %537 = vmatpush1.msra.mxu0 %v435
        %538 = vmatprep.subr.mxu0 0.0
        %539 = vmatpush1.msra.mxu0 %v436
        %540 = vmatprep.subr.mxu0 0.0
        %541 = vmatpush1.msra.mxu0 %v437
        %542 = vmatprep.subr.mxu0 0.0
        %543 = vmatpush1.msra.mxu0 %v438
        %544 = vmatprep.subr.mxu0 0.0
        %545 = vmatpush1.msra.mxu0 %v439
        %546 = vmatprep.subr.mxu0 0.0
        %547 = vmatpush1.msra.mxu0 %v440
        %548 = vmatprep.subr.mxu0 0.0
        %549 = vmatpush1.msra.mxu0 %v441
        %550 = vmatprep.subr.mxu0 0.0
        %551 = vmatpush1.msra.mxu0 %v442
        %552 = vmatprep.subr.mxu0 0.0
        %553 = vmatpush1.msra.mxu0 %v443
        %554 = vmatprep.subr.mxu0 0.0
        %555 = vmatpush1.msra.mxu0 %v444
        %556 = vmatprep.subr.mxu0 0.0
        %557 = vmatpush1.msra.mxu0 0.0
        %558 = vmatprep.subr.mxu0 0.0
        %559 = vmatpush1.msra.mxu0 0.0
        %560 = vmatprep.subr.mxu0 0.0
        %561 = vmatpush1.msra.mxu0 0.0
        %562 = vmatprep.subr.mxu0 0.0
        %563 = vmatpush1.msra.mxu0 0.0
        %564 = vmatprep.subr.mxu0 0.0
        %565 = vmatpush1.msra.mxu0 0.0
        %566 = vmatprep.subr.mxu0 0.0
        %567 = vmatpush1.msra.mxu0 0.0
        %568 = vmatprep.subr.mxu0 0.0
        %569 = vmatpush1.msra.mxu0 0.0
        %570 = vmatprep.subr.mxu0 0.0
        %571 = vmatpush1.msra.mxu0 0.0
        %572 = vmatprep.subr.mxu0 0.0
        %573 = vmatpush1.msra.mxu0 0.0
        %574 = vmatprep.subr.mxu0 0.0
        %575 = vmatpush1.msra.mxu0 0.0
        %576 = vmatprep.subr.mxu0 0.0
        %577 = vmatpush1.msra.mxu0 0.0
        %578 = vmatprep.subr.mxu0 0.0
        %579 = vmatpush1.msra.mxu0 0.0
        %580 = vmatprep.subr.mxu0 0.0
        %581 = vmatpush1.msra.mxu0 0.0
        %582 = vmatprep.subr.mxu0 0.0
        %583 = vmatpush1.msra.mxu0 0.0
        %584 = vmatprep.subr.mxu0 0.0
        %585 = vmatpush1.msra.mxu0 0.0
        %586 = vmatprep.subr.mxu0 0.0
        %587 = vmatpush1.msra.mxu0 0.0
        %588 = vmatprep.mubr.f32.mxu0 0.0
        %589 = vmatmul.mubr.f32.gmra.mrb[0].mxu0 %v520
        %v590 = vpop.f32.mrb[0].mxu0
        %v591 = vadd.f32 0.0, %v590
        %v592 = vpop.f32.mrb[0].mxu0
        %593 = vdwg.mxu0
        %v594 = vadd.f32 %v523, %v591
        %v595 = vmul.f32 %v520, 0.9
        %v596 = vmax.f32 %v594, 0.0
        %v597 = vadd.f32 %v595, %v596
        %s598 = scalar_lea.vmem %s252, 8 [#allocation4]
        %599 = vst [vmem:[%s598] sm:$0xff] %v597
        %s600 = scalar_lea.vmem [#allocation2], 16
        %v601 = vld [vmem:[%s600] sm:$0xff]
        %602 = vmatprep.subr.mxu0 0.0
        %603 = vmatpush1.msra.mxu0 %v429
        %604 = vmatprep.subr.mxu0 0.0
        %605 = vmatpush1.msra.mxu0 %v430
        %606 = vmatprep.subr.mxu0 0.0
        %607 = vmatpush1.msra.mxu0 %v431
        %608 = vmatprep.subr.mxu0 0.0
        %609 = vmatpush1.msra.mxu0 %v432
        %610 = vmatprep.subr.mxu0 0.0
        %611 = vmatpush1.msra.mxu0 %v433
        %612 = vmatprep.subr.mxu0 0.0
        %613 = vmatpush1.msra.mxu0 %v434
        %614 = vmatprep.subr.mxu0 0.0
        %615 = vmatpush1.msra.mxu0 %v435
        %616 = vmatprep.subr.mxu0 0.0
        %617 = vmatpush1.msra.mxu0 %v436
        %618 = vmatprep.subr.mxu0 0.0
        %619 = vmatpush1.msra.mxu0 %v437
        %620 = vmatprep.subr.mxu0 0.0
        %621 = vmatpush1.msra.mxu0 %v438
        %622 = vmatprep.subr.mxu0 0.0
        %623 = vmatpush1.msra.mxu0 %v439
        %624 = vmatprep.subr.mxu0 0.0
        %625 = vmatpush1.msra.mxu0 %v440
        %626 = vmatprep.subr.mxu0 0.0
        %627 = vmatpush1.msra.mxu0 %v441
        %628 = vmatprep.subr.mxu0 0.0
        %629 = vmatpush1.msra.mxu0 %v442
        %630 = vmatprep.subr.mxu0 0.0
        %631 = vmatpush1.msra.mxu0 %v443
        %632 = vmatprep.subr.mxu0 0.0
        %633 = vmatpush1.msra.mxu0 %v444
        %634 = vmatprep.subr.mxu0 0.0
        %635 = vmatpush1.msra.mxu0 0.0
        %636 = vmatprep.subr.mxu0 0.0
        %637 = vmatpush1.msra.mxu0 0.0
        %638 = vmatprep.subr.mxu0 0.0
        %639 = vmatpush1.msra.mxu0 0.0
        %640 = vmatprep.subr.mxu0 0.0
        %641 = vmatpush1.msra.mxu0 0.0
        %642 = vmatprep.subr.mxu0 0.0
        %643 = vmatpush1.msra.mxu0 0.0
        %644 = vmatprep.subr.mxu0 0.0
        %645 = vmatpush1.msra.mxu0 0.0
        %646 = vmatprep.subr.mxu0 0.0
        %647 = vmatpush1.msra.mxu0 0.0
        %648 = vmatprep.subr.mxu0 0.0
        %649 = vmatpush1.msra.mxu0 0.0
        %650 = vmatprep.subr.mxu0 0.0
        %651 = vmatpush1.msra.mxu0 0.0
        %652 = vmatprep.subr.mxu0 0.0
        %653 = vmatpush1.msra.mxu0 0.0
        %654 = vmatprep.subr.mxu0 0.0
        %655 = vmatpush1.msra.mxu0 0.0
        %656 = vmatprep.subr.mxu0 0.0
        %657 = vmatpush1.msra.mxu0 0.0
        %658 = vmatprep.subr.mxu0 0.0
        %659 = vmatpush1.msra.mxu0 0.0
        %660 = vmatprep.subr.mxu0 0.0
        %661 = vmatpush1.msra.mxu0 0.0
        %662 = vmatprep.subr.mxu0 0.0
        %663 = vmatpush1.msra.mxu0 0.0
        %664 = vmatprep.subr.mxu0 0.0
        %665 = vmatpush1.msra.mxu0 0.0
        %666 = vmatprep.mubr.f32.mxu0 0.0
        %667 = vmatmul.mubr.f32.gmra.mrb[0].mxu0 %v597
        %v668 = vpop.f32.mrb[0].mxu0
        %v669 = vadd.f32 0.0, %v668
        %v670 = vpop.f32.mrb[0].mxu0
        %671 = vdwg.mxu0
        %v672 = vadd.f32 %v601, %v669
        %v673 = vmul.f32 %v597, 0.9
        %v674 = vmax.f32 %v672, 0.0
        %v675 = vadd.f32 %v673, %v674
        %s676 = scalar_lea.vmem %s252, 16 [#allocation4]
        %677 = vst [vmem:[%s676] sm:$0xff] %v675
        %s678 = scalar_lea.vmem [#allocation2], 24
        %v679 = vld [vmem:[%s678] sm:$0xff]
        %680 = vmatprep.subr.mxu0 0.0
        %681 = vmatpush1.msra.mxu0 %v429
        %682 = vmatprep.subr.mxu0 0.0
        %683 = vmatpush1.msra.mxu0 %v430
        %684 = vmatprep.subr.mxu0 0.0
        %685 = vmatpush1.msra.mxu0 %v431
        %686 = vmatprep.subr.mxu0 0.0
        %687 = vmatpush1.msra.mxu0 %v432
        %688 = vmatprep.subr.mxu0 0.0
        %689 = vmatpush1.msra.mxu0 %v433
        %690 = vmatprep.subr.mxu0 0.0
        %691 = vmatpush1.msra.mxu0 %v434
        %692 = vmatprep.subr.mxu0 0.0
        %693 = vmatpush1.msra.mxu0 %v435
        %694 = vmatprep.subr.mxu0 0.0
        %695 = vmatpush1.msra.mxu0 %v436
        %696 = vmatprep.subr.mxu0 0.0
        %697 = vmatpush1.msra.mxu0 %v437
        %698 = vmatprep.subr.mxu0 0.0
        %699 = vmatpush1.msra.mxu0 %v438
        %700 = vmatprep.subr.mxu0 0.0
        %701 = vmatpush1.msra.mxu0 %v439
        %702 = vmatprep.subr.mxu0 0.0
        %703 = vmatpush1.msra.mxu0 %v440
        %704 = vmatprep.subr.mxu0 0.0
        %705 = vmatpush1.msra.mxu0 %v441
        %706 = vmatprep.subr.mxu0 0.0
        %707 = vmatpush1.msra.mxu0 %v442
        %708 = vmatprep.subr.mxu0 0.0
        %709 = vmatpush1.msra.mxu0 %v443
        %710 = vmatprep.subr.mxu0 0.0
        %711 = vmatpush1.msra.mxu0 %v444
        %712 = vmatprep.subr.mxu0 0.0
        %713 = vmatpush1.msra.mxu0 0.0
        %714 = vmatprep.subr.mxu0 0.0
        %715 = vmatpush1.msra.mxu0 0.0
        %716 = vmatprep.subr.mxu0 0.0
        %717 = vmatpush1.msra.mxu0 0.0
        %718 = vmatprep.subr.mxu0 0.0
        %719 = vmatpush1.msra.mxu0 0.0
        %720 = vmatprep.subr.mxu0 0.0
        %721 = vmatpush1.msra.mxu0 0.0
        %722 = vmatprep.subr.mxu0 0.0
        %723 = vmatpush1.msra.mxu0 0.0
        %724 = vmatprep.subr.mxu0 0.0
        %725 = vmatpush1.msra.mxu0 0.0
        %726 = vmatprep.subr.mxu0 0.0
        %727 = vmatpush1.msra.mxu0 0.0
        %728 = vmatprep.subr.mxu0 0.0
        %729 = vmatpush1.msra.mxu0 0.0
        %730 = vmatprep.subr.mxu0 0.0
        %731 = vmatpush1.msra.mxu0 0.0
        %732 = vmatprep.subr.mxu0 0.0
        %733 = vmatpush1.msra.mxu0 0.0
        %734 = vmatprep.subr.mxu0 0.0
        %735 = vmatpush1.msra.mxu0 0.0
        %736 = vmatprep.subr.mxu0 0.0
        %737 = vmatpush1.msra.mxu0 0.0
        %738 = vmatprep.subr.mxu0 0.0
        %739 = vmatpush1.msra.mxu0 0.0
        %740 = vmatprep.subr.mxu0 0.0
        %741 = vmatpush1.msra.mxu0 0.0
        %742 = vmatprep.subr.mxu0 0.0
        %743 = vmatpush1.msra.mxu0 0.0
        %744 = vmatprep.mubr.f32.mxu0 0.0
        %745 = vmatmul.mubr.f32.gmra.mrb[0].mxu0 %v675
        %v746 = vpop.f32.mrb[0].mxu0
        %v747 = vadd.f32 0.0, %v746
        %v748 = vpop.f32.mrb[0].mxu0
        %749 = vdwg.mxu0
        %v750 = vadd.f32 %v679, %v747
        %v751 = vmul.f32 %v675, 0.9
        %v752 = vmax.f32 %v750, 0.0
        %v753 = vadd.f32 %v751, %v752
        %s754 = scalar_lea.vmem %s252, 24 [#allocation4]
        %755 = vst [vmem:[%s754] sm:$0xff] %v753
        %s756 = scalar_lea.vmem [#allocation2], 32
        %v757 = vld [vmem:[%s756] sm:$0xff]
        %758 = vmatprep.subr.mxu0 0.0
        %759 = vmatpush1.msra.mxu0 %v429
        %760 = vmatprep.subr.mxu0 0.0
        %761 = vmatpush1.msra.mxu0 %v430
        %762 = vmatprep.subr.mxu0 0.0
        %763 = vmatpush1.msra.mxu0 %v431
        %764 = vmatprep.subr.mxu0 0.0
        %765 = vmatpush1.msra.mxu0 %v432
        %766 = vmatprep.subr.mxu0 0.0
        %767 = vmatpush1.msra.mxu0 %v433
        %768 = vmatprep.subr.mxu0 0.0
        %769 = vmatpush1.msra.mxu0 %v434
        %770 = vmatprep.subr.mxu0 0.0
        %771 = vmatpush1.msra.mxu0 %v435
        %772 = vmatprep.subr.mxu0 0.0
        %773 = vmatpush1.msra.mxu0 %v436
        %774 = vmatprep.subr.mxu0 0.0
        %775 = vmatpush1.msra.mxu0 %v437
        %776 = vmatprep.subr.mxu0 0.0
        %777 = vmatpush1.msra.mxu0 %v438
        %778 = vmatprep.subr.mxu0 0.0
        %779 = vmatpush1.msra.mxu0 %v439
        %780 = vmatprep.subr.mxu0 0.0
        %781 = vmatpush1.msra.mxu0 %v440
        %782 = vmatprep.subr.mxu0 0.0
        %783 = vmatpush1.msra.mxu0 %v441
        %784 = vmatprep.subr.mxu0 0.0
        %785 = vmatpush1.msra.mxu0 %v442
        %786 = vmatprep.subr.mxu0 0.0
        %787 = vmatpush1.msra.mxu0 %v443
        %788 = vmatprep.subr.mxu0 0.0
        %789 = vmatpush1.msra.mxu0 %v444
        %790 = vmatprep.subr.mxu0 0.0
        %791 = vmatpush1.msra.mxu0 0.0
        %792 = vmatprep.subr.mxu0 0.0
        %793 = vmatpush1.msra.mxu0 0.0
        %794 = vmatprep.subr.mxu0 0.0
        %795 = vmatpush1.msra.mxu0 0.0
        %796 = vmatprep.subr.mxu0 0.0
        %797 = vmatpush1.msra.mxu0 0.0
        %798 = vmatprep.subr.mxu0 0.0
        %799 = vmatpush1.msra.mxu0 0.0
        %800 = vmatprep.subr.mxu0 0.0
        %801 = vmatpush1.msra.mxu0 0.0
        %802 = vmatprep.subr.mxu0 0.0
        %803 = vmatpush1.msra.mxu0 0.0
        %804 = vmatprep.subr.mxu0 0.0
        %805 = vmatpush1.msra.mxu0 0.0
        %806 = vmatprep.subr.mxu0 0.0
        %807 = vmatpush1.msra.mxu0 0.0
        %808 = vmatprep.subr.mxu0 0.0
        %809 = vmatpush1.msra.mxu0 0.0
        %810 = vmatprep.subr.mxu0 0.0
        %811 = vmatpush1.msra.mxu0 0.0
        %812 = vmatprep.subr.mxu0 0.0
        %813 = vmatpush1.msra.mxu0 0.0
        %814 = vmatprep.subr.mxu0 0.0
        %815 = vmatpush1.msra.mxu0 0.0
        %816 = vmatprep.subr.mxu0 0.0
        %817 = vmatpush1.msra.mxu0 0.0
        %818 = vmatprep.subr.mxu0 0.0
        %819 = vmatpush1.msra.mxu0 0.0
        %820 = vmatprep.subr.mxu0 0.0
        %821 = vmatpush1.msra.mxu0 0.0
        %822 = vmatprep.mubr.f32.mxu0 0.0
        %823 = vmatmul.mubr.f32.gmra.mrb[0].mxu0 %v753
        %v824 = vpop.f32.mrb[0].mxu0
        %v825 = vadd.f32 0.0, %v824
        %v826 = vpop.f32.mrb[0].mxu0
        %827 = vdwg.mxu0
        %v828 = vadd.f32 %v757, %v825
        %v829 = vmul.f32 %v753, 0.9
        %v830 = vmax.f32 %v828, 0.0
        %v831 = vadd.f32 %v829, %v830
        %s832 = scalar_lea.vmem %s252, 32 [#allocation4]
        %833 = vst [vmem:[%s832] sm:$0xff] %v831
        %s834 = scalar_lea.vmem [#allocation2], 40
        %v835 = vld [vmem:[%s834] sm:$0xff]
        %836 = vmatprep.subr.mxu0 0.0
        %837 = vmatpush1.msra.mxu0 %v429
        %838 = vmatprep.subr.mxu0 0.0
        %839 = vmatpush1.msra.mxu0 %v430
        %840 = vmatprep.subr.mxu0 0.0
        %841 = vmatpush1.msra.mxu0 %v431
        %842 = vmatprep.subr.mxu0 0.0
        %843 = vmatpush1.msra.mxu0 %v432
        %844 = vmatprep.subr.mxu0 0.0
        %845 = vmatpush1.msra.mxu0 %v433
        %846 = vmatprep.subr.mxu0 0.0
        %847 = vmatpush1.msra.mxu0 %v434
        %848 = vmatprep.subr.mxu0 0.0
        %849 = vmatpush1.msra.mxu0 %v435
        %850 = vmatprep.subr.mxu0 0.0
        %851 = vmatpush1.msra.mxu0 %v436
        %852 = vmatprep.subr.mxu0 0.0
        %853 = vmatpush1.msra.mxu0 %v437
        %854 = vmatprep.subr.mxu0 0.0
        %855 = vmatpush1.msra.mxu0 %v438
        %856 = vmatprep.subr.mxu0 0.0
        %857 = vmatpush1.msra.mxu0 %v439
        %858 = vmatprep.subr.mxu0 0.0
        %859 = vmatpush1.msra.mxu0 %v440
        %860 = vmatprep.subr.mxu0 0.0
        %861 = vmatpush1.msra.mxu0 %v441
        %862 = vmatprep.subr.mxu0 0.0
        %863 = vmatpush1.msra.mxu0 %v442
        %864 = vmatprep.subr.mxu0 0.0
        %865 = vmatpush1.msra.mxu0 %v443
        %866 = vmatprep.subr.mxu0 0.0
        %867 = vmatpush1.msra.mxu0 %v444
        %868 = vmatprep.subr.mxu0 0.0
        %869 = vmatpush1.msra.mxu0 0.0
        %870 = vmatprep.subr.mxu0 0.0
        %871 = vmatpush1.msra.mxu0 0.0
        %872 = vmatprep.subr.mxu0 0.0
        %873 = vmatpush1.msra.mxu0 0.0
        %874 = vmatprep.subr.mxu0 0.0
        %875 = vmatpush1.msra.mxu0 0.0
        %876 = vmatprep.subr.mxu0 0.0
        %877 = vmatpush1.msra.mxu0 0.0
        %878 = vmatprep.subr.mxu0 0.0
        %879 = vmatpush1.msra.mxu0 0.0
        %880 = vmatprep.subr.mxu0 0.0
        %881 = vmatpush1.msra.mxu0 0.0
        %882 = vmatprep.subr.mxu0 0.0
        %883 = vmatpush1.msra.mxu0 0.0
        %884 = vmatprep.subr.mxu0 0.0
        %885 = vmatpush1.msra.mxu0 0.0
        %886 = vmatprep.subr.mxu0 0.0
        %887 = vmatpush1.msra.mxu0 0.0
        %888 = vmatprep.subr.mxu0 0.0
        %889 = vmatpush1.msra.mxu0 0.0
        %890 = vmatprep.subr.mxu0 0.0
        %891 = vmatpush1.msra.mxu0 0.0
        %892 = vmatprep.subr.mxu0 0.0
        %893 = vmatpush1.msra.mxu0 0.0
        %894 = vmatprep.subr.mxu0 0.0
        %895 = vmatpush1.msra.mxu0 0.0
        %896 = vmatprep.subr.mxu0 0.0
        %897 = vmatpush1.msra.mxu0 0.0
        %898 = vmatprep.subr.mxu0 0.0
        %899 = vmatpush1.msra.mxu0 0.0
        %900 = vmatprep.mubr.f32.mxu0 0.0
        %901 = vmatmul.mubr.f32.gmra.mrb[0].mxu0 %v831
        %v902 = vpop.f32.mrb[0].mxu0
        %v903 = vadd.f32 0.0, %v902
        %v904 = vpop.f32.mrb[0].mxu0
        %905 = vdwg.mxu0
        %v906 = vadd.f32 %v835, %v903
        %v907 = vmul.f32 %v831, 0.9
        %v908 = vmax.f32 %v906, 0.0
        %v909 = vadd.f32 %v907, %v908
        %s910 = scalar_lea.vmem %s252, 40 [#allocation4]
        %911 = vst [vmem:[%s910] sm:$0xff] %v909
        %s912 = scalar_lea.vmem [#allocation2], 48
        %v913 = vld [vmem:[%s912] sm:$0xff]
        %914 = vmatprep.subr.mxu0 0.0
        %915 = vmatpush1.msra.mxu0 %v429
        %916 = vmatprep.subr.mxu0 0.0
        %917 = vmatpush1.msra.mxu0 %v430
        %918 = vmatprep.subr.mxu0 0.0
        %919 = vmatpush1.msra.mxu0 %v431
        %920 = vmatprep.subr.mxu0 0.0
        %921 = vmatpush1.msra.mxu0 %v432
        %922 = vmatprep.subr.mxu0 0.0
        %923 = vmatpush1.msra.mxu0 %v433
        %924 = vmatprep.subr.mxu0 0.0
        %925 = vmatpush1.msra.mxu0 %v434
        %926 = vmatprep.subr.mxu0 0.0
        %927 = vmatpush1.msra.mxu0 %v435
        %928 = vmatprep.subr.mxu0 0.0
        %929 = vmatpush1.msra.mxu0 %v436
        %930 = vmatprep.subr.mxu0 0.0
        %931 = vmatpush1.msra.mxu0 %v437
        %932 = vmatprep.subr.mxu0 0.0
        %933 = vmatpush1.msra.mxu0 %v438
        %934 = vmatprep.subr.mxu0 0.0
        %935 = vmatpush1.msra.mxu0 %v439
        %936 = vmatprep.subr.mxu0 0.0
        %937 = vmatpush1.msra.mxu0 %v440
        %938 = vmatprep.subr.mxu0 0.0
        %939 = vmatpush1.msra.mxu0 %v441
        %940 = vmatprep.subr.mxu0 0.0
        %941 = vmatpush1.msra.mxu0 %v442
        %942 = vmatprep.subr.mxu0 0.0
        %943 = vmatpush1.msra.mxu0 %v443
        %944 = vmatprep.subr.mxu0 0.0
        %945 = vmatpush1.msra.mxu0 %v444
        %946 = vmatprep.subr.mxu0 0.0
        %947 = vmatpush1.msra.mxu0 0.0
        %948 = vmatprep.subr.mxu0 0.0
        %949 = vmatpush1.msra.mxu0 0.0
        %950 = vmatprep.subr.mxu0 0.0
        %951 = vmatpush1.msra.mxu0 0.0
        %952 = vmatprep.subr.mxu0 0.0
        %953 = vmatpush1.msra.mxu0 0.0
        %954 = vmatprep.subr.mxu0 0.0
        %955 = vmatpush1.msra.mxu0 0.0
        %956 = vmatprep.subr.mxu0 0.0
        %957 = vmatpush1.msra.mxu0 0.0
        %958 = vmatprep.subr.mxu0 0.0
        %959 = vmatpush1.msra.mxu0 0.0
        %960 = vmatprep.subr.mxu0 0.0
        %961 = vmatpush1.msra.mxu0 0.0
        %962 = vmatprep.subr.mxu0 0.0
        %963 = vmatpush1.msra.mxu0 0.0
        %964 = vmatprep.subr.mxu0 0.0
        %965 = vmatpush1.msra.mxu0 0.0
        %966 = vmatprep.subr.mxu0 0.0
        %967 = vmatpush1.msra.mxu0 0.0
        %968 = vmatprep.subr.mxu0 0.0
        %969 = vmatpush1.msra.mxu0 0.0
        %970 = vmatprep.subr.mxu0 0.0
        %971 = vmatpush1.msra.mxu0 0.0
        %972 = vmatprep.subr.mxu0 0.0
        %973 = vmatpush1.msra.mxu0 0.0
        %974 = vmatprep.subr.mxu0 0.0
        %975 = vmatpush1.msra.mxu0 0.0
        %976 = vmatprep.subr.mxu0 0.0
        %977 = vmatpush1.msra.mxu0 0.0
        %978 = vmatprep.mubr.f32.mxu0 0.0
        %979 = vmatmul.mubr.f32.gmra.mrb[0].mxu0 %v909
        %v980 = vpop.f32.mrb[0].mxu0
        %v981 = vadd.f32 0.0, %v980
        %v982 = vpop.f32.mrb[0].mxu0
        %983 = vdwg.mxu0
        %v984 = vadd.f32 %v913, %v981
        %v985 = vmul.f32 %v909, 0.9
        %v986 = vmax.f32 %v984, 0.0
        %v987 = vadd.f32 %v985, %v986
        %s988 = scalar_lea.vmem %s252, 48 [#allocation4]
        %989 = vst [vmem:[%s988] sm:$0xff] %v987
        %s990 = scalar_lea.vmem [#allocation2], 56
        %v991 = vld [vmem:[%s990] sm:$0xff]
        %992 = vmatprep.subr.mxu0 0.0
        %993 = vmatpush1.msra.mxu0 %v429
        %994 = vmatprep.subr.mxu0 0.0
        %995 = vmatpush1.msra.mxu0 %v430
        %996 = vmatprep.subr.mxu0 0.0
        %997 = vmatpush1.msra.mxu0 %v431
        %998 = vmatprep.subr.mxu0 0.0
        %999 = vmatpush1.msra.mxu0 %v432
        %1000 = vmatprep.subr.mxu0 0.0
        %1001 = vmatpush1.msra.mxu0 %v433
        %1002 = vmatprep.subr.mxu0 0.0
        %1003 = vmatpush1.msra.mxu0 %v434
        %1004 = vmatprep.subr.mxu0 0.0
        %1005 = vmatpush1.msra.mxu0 %v435
        %1006 = vmatprep.subr.mxu0 0.0
        %1007 = vmatpush1.msra.mxu0 %v436
        %1008 = vmatprep.subr.mxu0 0.0
        %1009 = vmatpush1.msra.mxu0 %v437
        %1010 = vmatprep.subr.mxu0 0.0
        %1011 = vmatpush1.msra.mxu0 %v438
        %1012 = vmatprep.subr.mxu0 0.0
        %1013 = vmatpush1.msra.mxu0 %v439
        %1014 = vmatprep.subr.mxu0 0.0
        %1015 = vmatpush1.msra.mxu0 %v440
        %1016 = vmatprep.subr.mxu0 0.0
        %1017 = vmatpush1.msra.mxu0 %v441
        %1018 = vmatprep.subr.mxu0 0.0
        %1019 = vmatpush1.msra.mxu0 %v442
        %1020 = vmatprep.subr.mxu0 0.0
        %1021 = vmatpush1.msra.mxu0 %v443
        %1022 = vmatprep.subr.mxu0 0.0
        %1023 = vmatpush1.msra.mxu0 %v444
        %1024 = vmatprep.subr.mxu0 0.0
        %1025 = vmatpush1.msra.mxu0 0.0
        %1026 = vmatprep.subr.mxu0 0.0
        %1027 = vmatpush1.msra.mxu0 0.0
        %1028 = vmatprep.subr.mxu0 0.0
        %1029 = vmatpush1.msra.mxu0 0.0
        %1030 = vmatprep.subr.mxu0 0.0
        %1031 = vmatpush1.msra.mxu0 0.0
        %1032 = vmatprep.subr.mxu0 0.0
        %1033 = vmatpush1.msra.mxu0 0.0
        %1034 = vmatprep.subr.mxu0 0.0
        %1035 = vmatpush1.msra.mxu0 0.0
        %1036 = vmatprep.subr.mxu0 0.0
        %1037 = vmatpush1.msra.mxu0 0.0
        %1038 = vmatprep.subr.mxu0 0.0
        %1039 = vmatpush1.msra.mxu0 0.0
        %1040 = vmatprep.subr.mxu0 0.0
        %1041 = vmatpush1.msra.mxu0 0.0
        %1042 = vmatprep.subr.mxu0 0.0
        %1043 = vmatpush1.msra.mxu0 0.0
        %1044 = vmatprep.subr.mxu0 0.0
        %1045 = vmatpush1.msra.mxu0 0.0
        %1046 = vmatprep.subr.mxu0 0.0
        %1047 = vmatpush1.msra.mxu0 0.0
        %1048 = vmatprep.subr.mxu0 0.0
        %1049 = vmatpush1.msra.mxu0 0.0
        %1050 = vmatprep.subr.mxu0 0.0
        %1051 = vmatpush1.msra.mxu0 0.0
        %1052 = vmatprep.subr.mxu0 0.0
        %1053 = vmatpush1.msra.mxu0 0.0
        %1054 = vmatprep.subr.mxu0 0.0
        %1055 = vmatpush1.msra.mxu0 0.0
        %1056 = vmatprep.mubr.f32.mxu0 0.0
        %1057 = vmatmul.mubr.f32.gmra.mrb[0].mxu0 %v987
        %v1058 = vpop.f32.mrb[0].mxu0
        %v1059 = vadd.f32 0.0, %v1058
        %v1060 = vpop.f32.mrb[0].mxu0
        %1061 = vdwg.mxu0
        %v1062 = vadd.f32 %v991, %v1059
        %v1063 = vmul.f32 %v987, 0.9
        %v1064 = vmax.f32 %v1062, 0.0
        %v1065 = vadd.f32 %v1063, %v1064
        %s1066 = scalar_lea.vmem %s252, 56 [#allocation4]
        %1067 = vst [vmem:[%s1066] sm:$0xff] %v1065
        %1068 = vst [vmem:[#allocation3] sm:$0xff] %v1065
        %s1069 = sand.u32 %s158, 1
        %s1070 = scalar_lea.sflag [#allocation5], %s1069
        %s1071 = sand.u32 %s158, 1
        %s1072 = smul.addr %s1071, 64
        %s1073 = scalar_lea.vmem [#allocation4], %s1072
        // Predicated region
        $region45: #{tpu_custom_call.1} parent=39 // pred_check
          %p1074 = pneg %p168
        $region46: #{tpu_custom_call.1} parent=39 // pred_check_branch
          %1076 = sbr.rel (%p1074) target = $region48
        $region47: #{tpu_custom_call.1} parent=39 // pred_region
          %s1078 = ssub.s32 1024, 1024
          %1079 = vsyncadd %s1070, %s1078
          %s1080 = smul.addr %s24, 8
          %s1081 = sadd.s32 %s23, %s1080
          %s1082 = smul.addr %s1081, 128
          %s1083 = scalar_lea.hbm %s5, %s1082
          %s1084 = sshll.u32 %s1073, 4
          %s1085 = int_to_ptr.vmem [resolvable:$true] %s1084
          %1090 = dma.vmem_to_hbm [thread:$0]  %s1085, 1024, %s1083, %s1070, 128, 128, 8
        $region48: #{tpu_custom_call.1} parent=39 // pred_fallthru
          _
      $region40: #{tpu_custom_call.1} parent=5 // pred_fallthru
        _
      %p1091 = scmp.le.s32.totalorder 2, %s14
      // Predicated region
      $region49: #{tpu_custom_call.1} parent=5 // pred_check
        %p1092 = pneg %p1091
      $region50: #{tpu_custom_call.1} parent=5 // pred_check_branch
        %1094 = sbr.rel (%p1092) target = $region52
      $region51: #{tpu_custom_call.1} parent=5 // pred_region
        %s1095 = ssub.s32 %s14, 2
        // Predicated region
        $region53: #{tpu_custom_call.1} parent=51 // pred_check
          %p1096 = pneg %p174
        $region54: #{tpu_custom_call.1} parent=51 // pred_check_branch
          %1098 = sbr.rel (%p1096) target = $region56
        $region55: #{tpu_custom_call.1} parent=51 // pred_region
          %s1099 = sand.u32 %s159, 1
          %s1100 = scalar_lea.sflag [#allocation5], %s1099
          %s1101 = sand.u32 %s159, 1
          %s1102 = smul.addr %s1101, 64
          %s1103 = scalar_lea.vmem [#allocation4], %s1102
          %1104 = dma.done %s1100, 1024
        $region56: #{tpu_custom_call.1} parent=51 // pred_fallthru
          _
      $region52: #{tpu_custom_call.1} parent=5 // pred_fallthru
        _
    $region6: #{tpu_custom_call.1} parent=1 // loop_footer
      %s18 = sadd.s32 1, %s14
    $region7: #{tpu_custom_call.1} parent=1 // loop_footer_branch
      %13 = sbr.rel target = $region3
    $region8: #{tpu_custom_call.1} parent=1 // loop_exit
      _
    %1105 = vsyncpa [#allocation5], 1
    %s1106 = scalar_lea.sflag [#allocation5], 1
    %1107 = vsyncpa %s1106, 1

</llo_original>
